<compile_context>
chip_gen: v5e
topology: v5e:2x2
jax: 0.10.0
libtpu: 0.0.40
codegen_flags: <defaults>
</compile_context>

<pallas_src>
import jax
import jax.numpy as jnp
from jax.experimental import pallas as pl
from jax.experimental.pallas import tpu as pltpu


def _round_up(x, m):
    return ((x + m - 1) // m) * m


def _pad2(a, rows, cols):
    r, c = a.shape
    if r == rows and c == cols:
        return a
    return jnp.pad(a, ((0, rows - r), (0, cols - c)))


def residual_block_kernel(x_ref, w1_ref, b1_ref, w2_ref, b2_ref, o_ref):
    x = x_ref[...]                                    # f32 [bb, Dp]
    xb = x.astype(jnp.bfloat16)                       # bf16 MXU input
    # linear1 + relu (f32 accumulate, f32 epilogue)
    h = jnp.dot(xb, w1_ref[...], preferred_element_type=jnp.float32)
    h = jnp.maximum(h + b1_ref[...], 0.0)
    # linear2 + relu
    h2 = jnp.dot(h.astype(jnp.bfloat16), w2_ref[...],
                 preferred_element_type=jnp.float32)
    h2 = jnp.maximum(h2 + b2_ref[...], 0.0)
    # residual add with the exact f32 x
    o_ref[...] = (h2 + x).astype(o_ref.dtype)


def _build_call(Bp, Dp, block_b, out_dtype, single_buffer_weights):
    grid = (Bp // block_b,)
    resident = {}
    if single_buffer_weights:
        # Constant index_map -> block never changes; one buffer halves VMEM use.
        resident = dict(pipeline_mode=pl.Buffered(1))

    in_specs = [
        pl.BlockSpec((block_b, Dp), lambda i: (i, 0)),            # x tile
        pl.BlockSpec((Dp, Dp), lambda i: (0, 0), **resident),     # W1^T (bf16)
        pl.BlockSpec((1, Dp), lambda i: (0, 0), **resident),      # b1 (f32)
        pl.BlockSpec((Dp, Dp), lambda i: (0, 0), **resident),     # W2^T (bf16)
        pl.BlockSpec((1, Dp), lambda i: (0, 0), **resident),      # b2 (f32)
    ]
    out_specs = pl.BlockSpec((block_b, Dp), lambda i: (i, 0))

    # VMEM budget estimate -> scoped limit with headroom, capped for v7x (64 MiB
    # physical) while still raising the conservative v5e/v6e defaults.
    w_bytes = 2 * Dp * Dp * 2 + 2 * Dp * 4          # bf16 weights + f32 biases
    io_bytes = 2 * (2 * block_b * Dp * 4)           # double-buffered x / out tiles
    tmp_bytes = 2 * block_b * Dp * 4                # f32 intermediates in the body
    wbuf = 1 if single_buffer_weights else 2
    vmem_est = wbuf * w_bytes + io_bytes + tmp_bytes
    vmem_limit = int(min(max(2 * vmem_est, 16 * 2**20), 48 * 2**20))

    cost = pl.CostEstimate(
        flops=2 * 2 * Bp * Dp * Dp,                 # two [Bp,Dp] x [Dp,Dp] matmuls
        transcendentals=0,
        bytes_accessed=2 * Bp * Dp * 4 + 2 * Dp * Dp * 2 + 2 * Dp * 4,
    )

    return pl.pallas_call(
        residual_block_kernel,
        out_shape=jax.ShapeDtypeStruct((Bp, Dp), out_dtype),
        grid_spec=pltpu.PrefetchScalarGridSpec(
            num_scalar_prefetch=0,
            grid=grid,
            in_specs=in_specs,
            out_specs=out_specs,
        ),
        compiler_params=pltpu.CompilerParams(
            dimension_semantics=("parallel",),       # megacore-shard batch tiles
            vmem_limit_bytes=vmem_limit,
        ),
        cost_estimate=cost,
    )


def residual_block(x, w1_t, b1, w2_t, b2, *, block_b=None):
    """x: [B, D] f32. w*_t: [D, D] transposed to [in, out]. b*: [1, D] f32."""
    B, D = x.shape
    Dp = _round_up(D, 128)                     # lane-dense last dimension
    if block_b is None:
        block_b = min(256, _round_up(B, 8))    # amortize ~0.35us/step overhead
    block_b = max(8, _round_up(block_b, 8))    # f32 sublane multiple
    Bp = _round_up(B, block_b)

    xp = _pad2(x.astype(jnp.float32), Bp, Dp)
    w1p = _pad2(w1_t.astype(jnp.float32), Dp, Dp).astype(jnp.bfloat16)
    w2p = _pad2(w2_t.astype(jnp.float32), Dp, Dp).astype(jnp.bfloat16)
    b1p = _pad2(b1.astype(jnp.float32), 1, Dp)
    b2p = _pad2(b2.astype(jnp.float32), 1, Dp)

    out = None
    last_err = None
    for single in (True, False):
        try:
            out = _build_call(Bp, Dp, block_b, x.dtype, single)(
                xp, w1p, b1p, w2p, b2p)
            break
        except Exception as e:  # fallback if pipeline_mode/Buffered(1) unsupported
            last_err = e
    if out is None:
        raise last_err
    return out[:B, :D]


def init_params(key, input_dim):
    """Deterministic init mimicking nn.Linear default (uniform +/- 1/sqrt(in))."""
    k1, k2, k3, k4 = jax.random.split(key, 4)
    bound = 1.0 / jnp.sqrt(jnp.float32(input_dim))
    # PyTorch Linear weight is [out, in]; we store transposed [in, out].
    w1 = jax.random.uniform(k1, (input_dim, input_dim), jnp.float32, -bound, bound)
    b1 = jax.random.uniform(k2, (1, input_dim), jnp.float32, -bound, bound)
    w2 = jax.random.uniform(k3, (input_dim, input_dim), jnp.float32, -bound, bound)
    b2 = jax.random.uniform(k4, (1, input_dim), jnp.float32, -bound, bound)
    return w1, b1, w2, b2


def residual_block_ref(x, w1_t, b1, w2_t, b2):
    """Same arithmetic as the kernel (bf16 MXU inputs, f32 accumulate/epilogue)."""
    h = jnp.dot(x.astype(jnp.bfloat16), w1_t.astype(jnp.bfloat16),
                preferred_element_type=jnp.float32)
    h = jnp.maximum(h + b1, 0.0)
    h2 = jnp.dot(h.astype(jnp.bfloat16), w2_t.astype(jnp.bfloat16),
                 preferred_element_type=jnp.float32)
    h2 = jnp.maximum(h2 + b2, 0.0)
    return h2 + x


if __name__ == "__main__":
    key = jax.random.PRNGKey(0)

    cases = [
        # (batch, input_dim, block_b): lane-dense main case (grid of 4 parallel
        # batch tiles) + tiny case exercising the B/D padding path.
        (512, 256, 128),
        (8, 32, None),
    ]
    for batch, input_dim, bb in cases:
        case_key = jax.random.fold_in(key, input_dim)
        kx, kp = jax.random.split(case_key)
        x = jax.random.normal(kx, (batch, input_dim), jnp.float32)
        w1_t, b1, w2_t, b2 = init_params(kp, input_dim)

        out = residual_block(x, w1_t, b1, w2_t, b2, block_b=bb)
        out = jax.block_until_ready(out)

        assert out.shape == (batch, input_dim)

        # Tight check against the matched bf16-input / f32-accumulate reference.
        ref = residual_block_ref(x, w1_t, b1, w2_t, b2)
        assert jnp.allclose(out, ref, atol=1e-3, rtol=1e-3), (
            batch, input_dim, float(jnp.max(jnp.abs(out - ref))))

        # Loose sanity check against the pure-f32 formula (bf16 rounding only).
        ref_f32 = jnp.maximum(x @ w1_t + b1, 0.0)
        ref_f32 = jnp.maximum(ref_f32 @ w2_t + b2, 0.0) + x
        assert jnp.allclose(out, ref_f32, atol=5e-2, rtol=5e-2), (
            batch, input_dim, float(jnp.max(jnp.abs(out - ref_f32))))

    print("KERNEL_OK")
</pallas_src>

<mosaic_0001>
module attributes {stable_mosaic.version = 11 : i64} {
  func.func @residual_block_kernel(%arg0: i32, %arg1: memref<128x256xf32, #tpu.memory_space<vmem>>, %arg2: memref<256x256xbf16, #tpu.memory_space<vmem>>, %arg3: memref<1x256xf32, #tpu.memory_space<vmem>>, %arg4: memref<256x256xbf16, #tpu.memory_space<vmem>>, %arg5: memref<1x256xf32, #tpu.memory_space<vmem>>, %arg6: memref<128x256xf32, #tpu.memory_space<vmem>>) attributes {dimension_semantics = [#tpu.dimension_semantics<parallel>], iteration_bounds = array<i64: 4>, scalar_prefetch = 0 : i64, scratch_operands = 0 : i64, tpu.core_type = #tpu.core_type<tc>, window_params = [{transform_indices = @transform_0, window_bounds = array<i64: 128, 256>}, {pipeline_mode = #tpu.pipeline_mode<synchronous>, transform_indices = @transform_1, window_bounds = array<i64: 256, 256>}, {pipeline_mode = #tpu.pipeline_mode<synchronous>, transform_indices = @transform_2, window_bounds = array<i64: 1, 256>}, {pipeline_mode = #tpu.pipeline_mode<synchronous>, transform_indices = @transform_3, window_bounds = array<i64: 256, 256>}, {pipeline_mode = #tpu.pipeline_mode<synchronous>, transform_indices = @transform_4, window_bounds = array<i64: 1, 256>}, {transform_indices = @transform_5, window_bounds = array<i64: 128, 256>}]} {
    %c0 = arith.constant 0 : index
    %c0_0 = arith.constant 0 : index
    %0 = vector.load %arg1[%c0, %c0_0] : memref<128x256xf32, #tpu.memory_space<vmem>>, vector<128x256xf32>
    %1 = arith.truncf %0 : vector<128x256xf32> to vector<128x256xbf16>
    %c0_1 = arith.constant 0 : index
    %c0_2 = arith.constant 0 : index
    %2 = vector.load %arg2[%c0_1, %c0_2] : memref<256x256xbf16, #tpu.memory_space<vmem>>, vector<256x256xbf16>
    %cst = arith.constant dense<0.000000e+00> : vector<128x256xf32>
    %3 = tpu.matmul %1, %2, %cst {dimension_numbers = #tpu.dot_dimension_numbers<[1], [0], [0], [1], [0, 0, 1, 1], [], []>} : vector<128x256xbf16>, vector<256x256xbf16>, vector<128x256xf32> -> vector<128x256xf32>
    %c0_3 = arith.constant 0 : index
    %c0_4 = arith.constant 0 : index
    %4 = vector.load %arg3[%c0_3, %c0_4] : memref<1x256xf32, #tpu.memory_space<vmem>>, vector<1x256xf32>
    %5 = vector.broadcast %4 : vector<1x256xf32> to vector<128x256xf32>
    %6 = arith.addf %3, %5 : vector<128x256xf32>
    %cst_5 = arith.constant 0.000000e+00 : f32
    %7 = vector.broadcast %cst_5 : f32 to vector<128x256xf32>
    %8 = arith.maximumf %6, %7 : vector<128x256xf32>
    %9 = arith.truncf %8 : vector<128x256xf32> to vector<128x256xbf16>
    %c0_6 = arith.constant 0 : index
    %c0_7 = arith.constant 0 : index
    %10 = vector.load %arg4[%c0_6, %c0_7] : memref<256x256xbf16, #tpu.memory_space<vmem>>, vector<256x256xbf16>
    %cst_8 = arith.constant dense<0.000000e+00> : vector<128x256xf32>
    %11 = tpu.matmul %9, %10, %cst_8 {dimension_numbers = #tpu.dot_dimension_numbers<[1], [0], [0], [1], [0, 0, 1, 1], [], []>} : vector<128x256xbf16>, vector<256x256xbf16>, vector<128x256xf32> -> vector<128x256xf32>
    %c0_9 = arith.constant 0 : index
    %c0_10 = arith.constant 0 : index
    %12 = vector.load %arg5[%c0_9, %c0_10] : memref<1x256xf32, #tpu.memory_space<vmem>>, vector<1x256xf32>
    %13 = vector.broadcast %12 : vector<1x256xf32> to vector<128x256xf32>
    %14 = arith.addf %11, %13 : vector<128x256xf32>
    %cst_11 = arith.constant 0.000000e+00 : f32
    %15 = vector.broadcast %cst_11 : f32 to vector<128x256xf32>
    %16 = arith.maximumf %14, %15 : vector<128x256xf32>
    %17 = arith.addf %16, %0 : vector<128x256xf32>
    %c0_12 = arith.constant 0 : index
    %c0_13 = arith.constant 0 : index
    %18 = vector.load %arg6[%c0_12, %c0_13] : memref<128x256xf32, #tpu.memory_space<vmem>>, vector<128x256xf32>
    tpu.vector_store %arg6[%c0_12, %c0_13], %17 {strides = array<i32>} : memref<128x256xf32, #tpu.memory_space<vmem>>, vector<128x256xf32>,
    return
  }
  func.func @transform_0(%arg0: i32) -> (i32, i32) {
    %c0_i32 = arith.constant 0 : i32
    %c0_i32_0 = arith.constant 0 : i32
    return %arg0, %c0_i32 : i32, i32
  }
  func.func @transform_1(%arg0: i32) -> (i32, i32) {
    %c0_i32 = arith.constant 0 : i32
    %c0_i32_0 = arith.constant 0 : i32
    %c0_i32_1 = arith.constant 0 : i32
    return %c0_i32, %c0_i32_0 : i32, i32
  }
  func.func @transform_2(%arg0: i32) -> (i32, i32) {
    %c0_i32 = arith.constant 0 : i32
    %c0_i32_0 = arith.constant 0 : i32
    %c0_i32_1 = arith.constant 0 : i32
    return %c0_i32, %c0_i32_0 : i32, i32
  }
  func.func @transform_3(%arg0: i32) -> (i32, i32) {
    %c0_i32 = arith.constant 0 : i32
    %c0_i32_0 = arith.constant 0 : i32
    %c0_i32_1 = arith.constant 0 : i32
    return %c0_i32, %c0_i32_0 : i32, i32
  }
  func.func @transform_4(%arg0: i32) -> (i32, i32) {
    %c0_i32 = arith.constant 0 : i32
    %c0_i32_0 = arith.constant 0 : i32
    %c0_i32_1 = arith.constant 0 : i32
    return %c0_i32, %c0_i32_0 : i32, i32
  }
  func.func @transform_5(%arg0: i32) -> (i32, i32) {
    %c0_i32 = arith.constant 0 : i32
    %c0_i32_0 = arith.constant 0 : i32
    return %arg0, %c0_i32 : i32, i32
  }
}

module attributes {stable_mosaic.version = 11 : i64} {
  func.func @residual_block_kernel(%arg0: i32, %arg1: memref<128x256xf32, #tpu.memory_space<vmem>>, %arg2: memref<256x256xbf16, #tpu.memory_space<vmem>>, %arg3: memref<1x256xf32, #tpu.memory_space<vmem>>, %arg4: memref<256x256xbf16, #tpu.memory_space<vmem>>, %arg5: memref<1x256xf32, #tpu.memory_space<vmem>>, %arg6: memref<128x256xf32, #tpu.memory_space<vmem>>) attributes {dimension_semantics = [#tpu.dimension_semantics<parallel>], iteration_bounds = array<i64: 4>, scalar_prefetch = 0 : i64, scratch_operands = 0 : i64, tpu.core_type = #tpu.core_type<tc>, window_params = [{transform_indices = @transform_0, window_bounds = array<i64: 128, 256>}, {pipeline_mode = #tpu.pipeline_mode<synchronous>, transform_indices = @transform_1, window_bounds = array<i64: 256, 256>}, {pipeline_mode = #tpu.pipeline_mode<synchronous>, transform_indices = @transform_2, window_bounds = array<i64: 1, 256>}, {pipeline_mode = #tpu.pipeline_mode<synchronous>, transform_indices = @transform_3, window_bounds = array<i64: 256, 256>}, {pipeline_mode = #tpu.pipeline_mode<synchronous>, transform_indices = @transform_4, window_bounds = array<i64: 1, 256>}, {transform_indices = @transform_5, window_bounds = array<i64: 128, 256>}]} {
    %c0 = arith.constant 0 : index
    %c0_0 = arith.constant 0 : index
    %0 = vector.load %arg1[%c0, %c0_0] : memref<128x256xf32, #tpu.memory_space<vmem>>, vector<128x256xf32>
    %1 = arith.truncf %0 : vector<128x256xf32> to vector<128x256xbf16>
    %c0_1 = arith.constant 0 : index
    %c0_2 = arith.constant 0 : index
    %2 = vector.load %arg2[%c0_1, %c0_2] : memref<256x256xbf16, #tpu.memory_space<vmem>>, vector<256x256xbf16>
    %cst = arith.constant dense<0.000000e+00> : vector<128x256xf32>
    %3 = tpu.matmul %1, %2, %cst {dimension_numbers = #tpu.dot_dimension_numbers<[1], [0], [0], [1], [0, 0, 1, 1], [], []>} : vector<128x256xbf16>, vector<256x256xbf16>, vector<128x256xf32> -> vector<128x256xf32>
    %c0_3 = arith.constant 0 : index
    %c0_4 = arith.constant 0 : index
    %4 = vector.load %arg3[%c0_3, %c0_4] : memref<1x256xf32, #tpu.memory_space<vmem>>, vector<1x256xf32>
    %5 = vector.broadcast %4 : vector<1x256xf32> to vector<128x256xf32>
    %6 = arith.addf %3, %5 : vector<128x256xf32>
    %cst_5 = arith.constant 0.000000e+00 : f32
    %7 = vector.broadcast %cst_5 : f32 to vector<128x256xf32>
    %8 = arith.maximumf %6, %7 : vector<128x256xf32>
    %9 = arith.truncf %8 : vector<128x256xf32> to vector<128x256xbf16>
    %c0_6 = arith.constant 0 : index
    %c0_7 = arith.constant 0 : index
    %10 = vector.load %arg4[%c0_6, %c0_7] : memref<256x256xbf16, #tpu.memory_space<vmem>>, vector<256x256xbf16>
    %cst_8 = arith.constant dense<0.000000e+00> : vector<128x256xf32>
    %11 = tpu.matmul %9, %10, %cst_8 {dimension_numbers = #tpu.dot_dimension_numbers<[1], [0], [0], [1], [0, 0, 1, 1], [], []>} : vector<128x256xbf16>, vector<256x256xbf16>, vector<128x256xf32> -> vector<128x256xf32>
    %c0_9 = arith.constant 0 : index
    %c0_10 = arith.constant 0 : index
    %12 = vector.load %arg5[%c0_9, %c0_10] : memref<1x256xf32, #tpu.memory_space<vmem>>, vector<1x256xf32>
    %13 = vector.broadcast %12 : vector<1x256xf32> to vector<128x256xf32>
    %14 = arith.addf %11, %13 : vector<128x256xf32>
    %cst_11 = arith.constant 0.000000e+00 : f32
    %15 = vector.broadcast %cst_11 : f32 to vector<128x256xf32>
    %16 = arith.maximumf %14, %15 : vector<128x256xf32>
    %17 = arith.addf %16, %0 : vector<128x256xf32>
    %c0_12 = arith.constant 0 : index
    %c0_13 = arith.constant 0 : index
    %18 = vector.load %arg6[%c0_12, %c0_13] : memref<128x256xf32, #tpu.memory_space<vmem>>, vector<128x256xf32>
    tpu.vector_store %arg6[%c0_12, %c0_13], %17 {strides = array<i32>} : memref<128x256xf32, #tpu.memory_space<vmem>>, vector<128x256xf32>,
    return
  }
  func.func @transform_0(%arg0: i32) -> (i32, i32) {
    %c0_i32 = arith.constant 0 : i32
    %c0_i32_0 = arith.constant 0 : i32
    return %arg0, %c0_i32 : i32, i32
  }
  func.func @transform_1(%arg0: i32) -> (i32, i32) {
    %c0_i32 = arith.constant 0 : i32
    %c0_i32_0 = arith.constant 0 : i32
    %c0_i32_1 = arith.constant 0 : i32
    return %c0_i32, %c0_i32_0 : i32, i32
  }
  func.func @transform_2(%arg0: i32) -> (i32, i32) {
    %c0_i32 = arith.constant 0 : i32
    %c0_i32_0 = arith.constant 0 : i32
    %c0_i32_1 = arith.constant 0 : i32
    return %c0_i32, %c0_i32_0 : i32, i32
  }
  func.func @transform_3(%arg0: i32) -> (i32, i32) {
    %c0_i32 = arith.constant 0 : i32
    %c0_i32_0 = arith.constant 0 : i32
    %c0_i32_1 = arith.constant 0 : i32
    return %c0_i32, %c0_i32_0 : i32, i32
  }
  func.func @transform_4(%arg0: i32) -> (i32, i32) {
    %c0_i32 = arith.constant 0 : i32
    %c0_i32_0 = arith.constant 0 : i32
    %c0_i32_1 = arith.constant 0 : i32
    return %c0_i32, %c0_i32_0 : i32, i32
  }
  func.func @transform_5(%arg0: i32) -> (i32, i32) {
    %c0_i32 = arith.constant 0 : i32
    %c0_i32_0 = arith.constant 0 : i32
    return %arg0, %c0_i32 : i32, i32
  }
}

</mosaic_0001>

<llo_original>
// kernel: tpu_custom_call.1
$region0: #{tpu_custom_call.1}
  #allocation0 [shape = 'u32[]', space=smem, size = 0x4, offset = 0x4, fixed_abs, tag = 'smem constant byte address 0x4 - core index']
  #allocation1 [shape = 'u32[72,128]{1,0:T(1,128)}', space=vmem, size = 0x9000, scoped, tag = 'internal scratch']
  %s0 = inlined_call_operand.hbm [shape: f32[512,256], index: 0, kind: input, shape index: {}]
  %s1 = inlined_call_operand.hbm [shape: bf16[256,256], index: 1, kind: input, shape index: {}]
  %s2 = inlined_call_operand.hbm [shape: f32[1,256], index: 2, kind: input, shape index: {}]
  %s3 = inlined_call_operand.hbm [shape: bf16[256,256], index: 3, kind: input, shape index: {}]
  %s4 = inlined_call_operand.vmem [shape: f32[1,256], index: 4, kind: input, shape index: {}]
  %s5 = inlined_call_operand.hbm [shape: f32[512,256], index: 5, kind: output, shape index: {}]
  %s6 = sld [smem:[#allocation0]]
  $region69: #{tpu_custom_call.1} parent=0
    _
  %s8 = ssub.s32 1, %s6
  %s9 = scalar_select 0, %s8, %s6
  $region1: #{tpu_custom_call.1} parent=0
    #allocation2 [shape = 'u8[262144]{0}', space=vmem, size = 0x40000, scoped, tag = 'input window, operand 0']
    #allocation3 [shape = 's32[2]{0}', space=sflag, size = 0x8, scoped, tag = 'scoped memory for tpu_custom_call.1']
    #allocation4 [shape = 's32[2]{0}', space=sflag, size = 0x8, scoped, tag = 'scoped memory for tpu_custom_call.1']
    #allocation5 [shape = 'u8[131072]{0}', space=vmem, size = 0x20000, scoped, tag = 'input window, operand 1, single buffered']
    #allocation6 [shape = 's32[1]{0}', space=sflag, size = 0x4, scoped, tag = 'scoped memory for tpu_custom_call.1']
    #allocation7 [shape = 'u8[1024]{0}', space=vmem, size = 0x400, scoped, tag = 'input window, operand 2, single buffered']
    #allocation8 [shape = 'u8[131072]{0}', space=vmem, size = 0x20000, scoped, tag = 'input window, operand 3, single buffered']
    #allocation9 [shape = 's32[1]{0}', space=sflag, size = 0x4, scoped, tag = 'scoped memory for tpu_custom_call.1']
    #allocation10 [shape = 'u8[262144]{0}', space=vmem, size = 0x40000, scoped, tag = 'output window, operand 0']
    %10 = vsyncpa [#allocation3], 0
    %s11 = scalar_lea.sflag [#allocation3], 1
    %12 = vsyncpa %s11, 0
    %13 = vsyncpa [#allocation6], 0
    %14 = vsyncpa [#allocation9], 0
    %15 = vsyncpa [#allocation4], 0
    %s16 = scalar_lea.sflag [#allocation4], 1
    %17 = vsyncpa %s16, 0
    loop: start=0, step=1, limit=6
    $region2: #{tpu_custom_call.1} parent=1 // loop_pre_header
      _
    $region3: #{tpu_custom_call.1} parent=1 // loop_header
      %s19 = sphi 0, %s23
      %p20 = scmp.ge.s32.totalorder %s19, 6
      %s29 = sphi 0, %s31
      %s32 = sphi 0, %s29
      %s33 = sphi 0, %s32
      %s49 = sphi 0, %s33
      %s53 = sphi 0, %s53
      %s55 = sphi 0, %s53
      %s56 = sphi 0, %s55
      %s70 = sphi 0, %s56
      %s74 = sphi 0, %s74
      %s76 = sphi 0, %s74
      %s77 = sphi 0, %s76
      %s91 = sphi 0, %s77
      %s95 = sphi 0, %s95
      %s97 = sphi 0, %s95
      %s98 = sphi 0, %s97
      %s112 = sphi 0, %s98
      %s116 = sphi 0, %s116
      %s118 = sphi 0, %s116
      %s119 = sphi 0, %s118
      %s133 = sphi 0, %s119
      %s139 = sphi 0, %s141
      %s142 = sphi 0, %s139
      %s143 = sphi 0, %s142
      %s159 = sphi 0, %s143
    $region4: #{tpu_custom_call.1} parent=1 // loop_header_branch
      %22 = sbr.rel (%p20) target = $region8
    $region5: #{tpu_custom_call.1} parent=1 // loop_body
      %s24 = ssub.s32 %s19, 1
      %s25 = ssub.s32 %s19, 2
      %s26 = sadd.s32 %s19, 1
      %s27 = ssub.s32 %s19, %s26
      %p28 = scmp.eq.s32.totalorder %s27, 0
      %s30 = sadd.s32 %s29, 1
      %s31 = scalar_select %p28, %s29, %s30
      %p34 = pneg %p28
      %p35 = scmp.eq.s32.totalorder %s19, 3
      %p36 = por %p34, %p35
      %p37 = scmp.ne.s32.totalorder %s29, %s32
      %p38 = scmp.eq.s32.totalorder %s19, 0
      %p39 = por %p37, %p38
      %p40 = scmp.ne.s32.totalorder %s29, %s32
      %p41 = scmp.eq.s32.totalorder %s24, 3
      %p42 = por %p40, %p41
      %p43 = scmp.ne.s32.totalorder %s32, %s33
      %p44 = scmp.eq.s32.totalorder %s24, 0
      %p45 = por %p43, %p44
      %p46 = scmp.ne.s32.totalorder %s32, %s33
      %p47 = scmp.eq.s32.totalorder %s25, 3
      %p48 = por %p46, %p47
      %p50 = scmp.ne.s32.totalorder %s33, %s49
      %p51 = scmp.eq.s32.totalorder %s25, 0
      %p52 = por %p50, %p51
      %s54 = sadd.s32 %s53, 1
      %p57 = scmp.eq.s32.totalorder %s19, 3
      %p58 = scmp.ne.s32.totalorder %s53, %s55
      %p59 = scmp.eq.s32.totalorder %s19, 0
      %p60 = por %p58, %p59
      %p61 = scmp.ne.s32.totalorder %s53, %s55
      %p62 = scmp.eq.s32.totalorder %s24, 3
      %p63 = por %p61, %p62
      %p64 = scmp.ne.s32.totalorder %s55, %s56
      %p65 = scmp.eq.s32.totalorder %s24, 0
      %p66 = por %p64, %p65
      %p67 = scmp.ne.s32.totalorder %s55, %s56
      %p68 = scmp.eq.s32.totalorder %s25, 3
      %p69 = por %p67, %p68
      %p71 = scmp.ne.s32.totalorder %s56, %s70
      %p72 = scmp.eq.s32.totalorder %s25, 0
      %p73 = por %p71, %p72
      %s75 = sadd.s32 %s74, 1
      %p78 = scmp.eq.s32.totalorder %s19, 3
      %p79 = scmp.ne.s32.totalorder %s74, %s76
      %p80 = scmp.eq.s32.totalorder %s19, 0
      %p81 = por %p79, %p80
      %p82 = scmp.ne.s32.totalorder %s74, %s76
      %p83 = scmp.eq.s32.totalorder %s24, 3
      %p84 = por %p82, %p83
      %p85 = scmp.ne.s32.totalorder %s76, %s77
      %p86 = scmp.eq.s32.totalorder %s24, 0
      %p87 = por %p85, %p86
      %p88 = scmp.ne.s32.totalorder %s76, %s77
      %p89 = scmp.eq.s32.totalorder %s25, 3
      %p90 = por %p88, %p89
      %p92 = scmp.ne.s32.totalorder %s77, %s91
      %p93 = scmp.eq.s32.totalorder %s25, 0
      %p94 = por %p92, %p93
      %s96 = sadd.s32 %s95, 1
      %p99 = scmp.eq.s32.totalorder %s19, 3
      %p100 = scmp.ne.s32.totalorder %s95, %s97
      %p101 = scmp.eq.s32.totalorder %s19, 0
      %p102 = por %p100, %p101
      %p103 = scmp.ne.s32.totalorder %s95, %s97
      %p104 = scmp.eq.s32.totalorder %s24, 3
      %p105 = por %p103, %p104
      %p106 = scmp.ne.s32.totalorder %s97, %s98
      %p107 = scmp.eq.s32.totalorder %s24, 0
      %p108 = por %p106, %p107
      %p109 = scmp.ne.s32.totalorder %s97, %s98
      %p110 = scmp.eq.s32.totalorder %s25, 3
      %p111 = por %p109, %p110
      %p113 = scmp.ne.s32.totalorder %s98, %s112
      %p114 = scmp.eq.s32.totalorder %s25, 0
      %p115 = por %p113, %p114
      %s117 = sadd.s32 %s116, 1
      %p120 = scmp.eq.s32.totalorder %s19, 3
      %p121 = scmp.ne.s32.totalorder %s116, %s118
      %p122 = scmp.eq.s32.totalorder %s19, 0
      %p123 = por %p121, %p122
      %p124 = scmp.ne.s32.totalorder %s116, %s118
      %p125 = scmp.eq.s32.totalorder %s24, 3
      %p126 = por %p124, %p125
      %p127 = scmp.ne.s32.totalorder %s118, %s119
      %p128 = scmp.eq.s32.totalorder %s24, 0
      %p129 = por %p127, %p128
      %p130 = scmp.ne.s32.totalorder %s118, %s119
      %p131 = scmp.eq.s32.totalorder %s25, 3
      %p132 = por %p130, %p131
      %p134 = scmp.ne.s32.totalorder %s119, %s133
      %p135 = scmp.eq.s32.totalorder %s25, 0
      %p136 = por %p134, %p135
      %s137 = ssub.s32 %s19, %s26
      %p138 = scmp.eq.s32.totalorder %s137, 0
      %s140 = sadd.s32 %s139, 1
      %s141 = scalar_select %p138, %s139, %s140
      %p144 = pneg %p138
      %p145 = scmp.eq.s32.totalorder %s19, 3
      %p146 = por %p144, %p145
      %p147 = scmp.ne.s32.totalorder %s139, %s142
      %p148 = scmp.eq.s32.totalorder %s19, 0
      %p149 = por %p147, %p148
      %p150 = scmp.ne.s32.totalorder %s139, %s142
      %p151 = scmp.eq.s32.totalorder %s24, 3
      %p152 = por %p150, %p151
      %p153 = scmp.ne.s32.totalorder %s142, %s143
      %p154 = scmp.eq.s32.totalorder %s24, 0
      %p155 = por %p153, %p154
      %p156 = scmp.ne.s32.totalorder %s142, %s143
      %p157 = scmp.eq.s32.totalorder %s25, 3
      %p158 = por %p156, %p157
      %p160 = scmp.ne.s32.totalorder %s143, %s159
      %p161 = scmp.eq.s32.totalorder %s25, 0
      %p162 = por %p160, %p161
      %p163 = scmp.le.s32.totalorder 1, %s19
      %p164 = scmp.lt.s32.totalorder %s19, 5
      %p165 = pnand %p163, %p164
      %p166 = pneg %p165
      // Predicated region
      $region9: #{tpu_custom_call.1} parent=5 // pred_check
        _
      $region10: #{tpu_custom_call.1} parent=5 // pred_check_branch
        %168 = sbr.rel (%p165) target = $region12
      $region11: #{tpu_custom_call.1} parent=5 // pred_region
        %s169 = ssub.s32 %s19, 1
        // Predicated region
        $region13: #{tpu_custom_call.1} parent=11 // pred_check
          %p170 = pneg %p66
        $region14: #{tpu_custom_call.1} parent=11 // pred_check_branch
          %172 = sbr.rel (%p170) target = $region16
        $region15: #{tpu_custom_call.1} parent=11 // pred_region
          %174 = vsyncadd [#allocation6], 0
          %s175 = sshll.u32 %s1, 4
          %s176 = int_to_ptr.hbm [resolvable:$true] %s175
          %s177 = sshll.u32 [#allocation5], 4
          %s178 = int_to_ptr.vmem [resolvable:$true] %s177
          %183 = dma.hbm_to_vmem [thread:$0]  %s176, 4096, %s178, [#allocation6], 128, 128, 8
        $region16: #{tpu_custom_call.1} parent=11 // pred_fallthru
          _
        // Predicated region
        $region17: #{tpu_custom_call.1} parent=11 // pred_check
          %p184 = pneg %p87
        $region18: #{tpu_custom_call.1} parent=11 // pred_check_branch
          %186 = sbr.rel (%p184) target = $region20
        $region19: #{tpu_custom_call.1} parent=11 // pred_region
          %188 = vsyncadd [#allocation6], 0
          %s190 = sshll.u32 %s2, 4
          %s191 = int_to_ptr.hbm [resolvable:$true] %s190
          %s192 = sshll.u32 [#allocation7], 4
          %s193 = int_to_ptr.vmem [resolvable:$true] %s192
          %195 = dma.hbm_to_vmem [thread:$0]  %s191, 32, %s193, [#allocation6]
        $region20: #{tpu_custom_call.1} parent=11 // pred_fallthru
          _
        // Predicated region
        $region21: #{tpu_custom_call.1} parent=11 // pred_check
          %p196 = pneg %p108
        $region22: #{tpu_custom_call.1} parent=11 // pred_check_branch
          %198 = sbr.rel (%p196) target = $region24
        $region23: #{tpu_custom_call.1} parent=11 // pred_region
          %200 = vsyncadd [#allocation9], 0
          %s201 = sshll.u32 %s3, 4
          %s202 = int_to_ptr.hbm [resolvable:$true] %s201
          %s203 = sshll.u32 [#allocation8], 4
          %s204 = int_to_ptr.vmem [resolvable:$true] %s203
          %209 = dma.hbm_to_vmem [thread:$0]  %s202, 4096, %s204, [#allocation9], 128, 128, 8
        $region24: #{tpu_custom_call.1} parent=11 // pred_fallthru
          _
        // Predicated region
        $region25: #{tpu_custom_call.1} parent=11 // pred_check
          %p210 = pneg %p129
        $region26: #{tpu_custom_call.1} parent=11 // pred_check_branch
          %212 = sbr.rel (%p210) target = $region28
        $region27: #{tpu_custom_call.1} parent=11 // pred_region
          _
        $region28: #{tpu_custom_call.1} parent=11 // pred_fallthru
          _
      $region12: #{tpu_custom_call.1} parent=5 // pred_fallthru
        _
      %p213 = scmp.lt.s32.totalorder %s19, 4
      // Predicated region
      $region29: #{tpu_custom_call.1} parent=5 // pred_check
        %p214 = pneg %p213
      $region30: #{tpu_custom_call.1} parent=5 // pred_check_branch
        %216 = sbr.rel (%p214) target = $region32
      $region31: #{tpu_custom_call.1} parent=5 // pred_region
        // Predicated region
        $region33: #{tpu_custom_call.1} parent=31 // pred_check
          %p217 = pneg %p39
        $region34: #{tpu_custom_call.1} parent=31 // pred_check_branch
          %219 = sbr.rel (%p217) target = $region36
        $region35: #{tpu_custom_call.1} parent=31 // pred_region
          %s220 = sand.u32 %s29, 1
          %s221 = scalar_lea.sflag [#allocation3], %s220
          %s222 = sand.u32 %s29, 1
          %s223 = smul.addr %s222, 256
          %s224 = scalar_lea.vmem [#allocation2], %s223
          %s225 = smul.u32 16, %s19
          %227 = vsyncadd %s221, 0
          %s228 = smul.addr %s225, 2
          %s229 = smul.addr %s228, 8
          %s230 = scalar_lea.hbm %s0, %s229
          %s231 = sshll.u32 %s230, 4
          %s232 = int_to_ptr.hbm [resolvable:$true] %s231
          %s233 = sshll.u32 %s224, 4
          %s234 = int_to_ptr.vmem [resolvable:$true] %s233
          %239 = dma.hbm_to_vmem [thread:$0]  %s232, 4096, %s234, %s221, 256, 256, 16
        $region36: #{tpu_custom_call.1} parent=31 // pred_fallthru
          _
      $region32: #{tpu_custom_call.1} parent=5 // pred_fallthru
        _
      %p240 = scmp.le.s32.totalorder 1, %s19
      %p241 = scmp.lt.s32.totalorder %s19, 5
      %p242 = pnand %p240, %p241
      %p243 = pneg %p242
      // Predicated region
      $region37: #{tpu_custom_call.1} parent=5 // pred_check
        _
      $region38: #{tpu_custom_call.1} parent=5 // pred_check_branch
        %245 = sbr.rel (%p242) target = $region40
      $region39: #{tpu_custom_call.1} parent=5 // pred_region
        %s246 = ssub.s32 %s19, 1
        %s247 = sand.u32 %s32, 1
        %s248 = scalar_lea.sflag [#allocation3], %s247
        %s249 = sand.u32 %s32, 1
        %s250 = smul.addr %s249, 256
        %s251 = scalar_lea.vmem [#allocation2], %s250
        // Predicated region
        $region41: #{tpu_custom_call.1} parent=39 // pred_check
          %p252 = pneg %p45
        $region42: #{tpu_custom_call.1} parent=39 // pred_check_branch
          %254 = sbr.rel (%p252) target = $region44
        $region43: #{tpu_custom_call.1} parent=39 // pred_region
          %256 = dma.done %s248, 4096
        $region44: #{tpu_custom_call.1} parent=39 // pred_fallthru
          _
        // Predicated region
        $region45: #{tpu_custom_call.1} parent=39 // pred_check
          %p257 = pneg %p66
        $region46: #{tpu_custom_call.1} parent=39 // pred_check_branch
          %259 = sbr.rel (%p257) target = $region48
        $region47: #{tpu_custom_call.1} parent=39 // pred_region
          %261 = dma.done [#allocation6], 4096
        $region48: #{tpu_custom_call.1} parent=39 // pred_fallthru
          _
        // Predicated region
        $region49: #{tpu_custom_call.1} parent=39 // pred_check
          %p262 = pneg %p87
        $region50: #{tpu_custom_call.1} parent=39 // pred_check_branch
          %264 = sbr.rel (%p262) target = $region52
        $region51: #{tpu_custom_call.1} parent=39 // pred_region
          %266 = dma.done [#allocation6], 32
        $region52: #{tpu_custom_call.1} parent=39 // pred_fallthru
          _
        // Predicated region
        $region53: #{tpu_custom_call.1} parent=39 // pred_check
          %p267 = pneg %p108
        $region54: #{tpu_custom_call.1} parent=39 // pred_check_branch
          %269 = sbr.rel (%p267) target = $region56
        $region55: #{tpu_custom_call.1} parent=39 // pred_region
          %271 = dma.done [#allocation9], 4096
        $region56: #{tpu_custom_call.1} parent=39 // pred_fallthru
          _
        %s272 = sand.u32 %s32, 1
        %s273 = scalar_lea.sflag [#allocation3], %s272
        %s274 = sand.u32 %s32, 1
        %s275 = smul.addr %s274, 256
        %s276 = scalar_lea.vmem [#allocation2], %s275
        %p277 = pneg %p45
        %p278 = pneg %p42
        %p279 = pneg %p66
        %p280 = pneg %p63
        %p281 = pneg %p87
        %p282 = pneg %p84
        %p283 = pneg %p108
        %p284 = pneg %p105
        %p285 = pneg %p129
        %p286 = pneg %p126
        %p287 = pneg %p155
        %p288 = pneg %p152
        %s289 = sand.u32 %s142, 1
        %s290 = scalar_lea.sflag [#allocation4], %s289
        %s291 = sand.u32 %s142, 1
        %s292 = smul.addr %s291, 256
        %s293 = scalar_lea.vmem [#allocation10], %s292
        %s294 = smul.u32 16, %s24
        %s295 = smul.u32 16, %s24
        %v296 = vld [vmem:[%s251] sm:$0xff]
        %v297 = vld [vmem:[%s251 + $0x8] sm:$0xff]
        %v298 = vld [vmem:[%s251 + $0x10] sm:$0xff]
        %v299 = vld [vmem:[%s251 + $0x18] sm:$0xff]
        %v300 = vld [vmem:[%s251 + $0x20] sm:$0xff]
        %v301 = vld [vmem:[%s251 + $0x28] sm:$0xff]
        %v302 = vld [vmem:[%s251 + $0x30] sm:$0xff]
        %v303 = vld [vmem:[%s251 + $0x38] sm:$0xff]
        %v304 = vld [vmem:[%s251 + $0x40] sm:$0xff]
        %v305 = vld [vmem:[%s251 + $0x48] sm:$0xff]
        %v306 = vld [vmem:[%s251 + $0x50] sm:$0xff]
        %v307 = vld [vmem:[%s251 + $0x58] sm:$0xff]
        %v308 = vld [vmem:[%s251 + $0x60] sm:$0xff]
        %v309 = vld [vmem:[%s251 + $0x68] sm:$0xff]
        %v310 = vld [vmem:[%s251 + $0x70] sm:$0xff]
        %v311 = vld [vmem:[%s251 + $0x78] sm:$0xff]
        %v312 = vld [vmem:[%s251 + $0x80] sm:$0xff]
        %v313 = vld [vmem:[%s251 + $0x88] sm:$0xff]
        %v314 = vld [vmem:[%s251 + $0x90] sm:$0xff]
        %v315 = vld [vmem:[%s251 + $0x98] sm:$0xff]
        %v316 = vld [vmem:[%s251 + $0xa0] sm:$0xff]
        %v317 = vld [vmem:[%s251 + $0xa8] sm:$0xff]
        %v318 = vld [vmem:[%s251 + $0xb0] sm:$0xff]
        %v319 = vld [vmem:[%s251 + $0xb8] sm:$0xff]
        %v320 = vld [vmem:[%s251 + $0xc0] sm:$0xff]
        %v321 = vld [vmem:[%s251 + $0xc8] sm:$0xff]
        %v322 = vld [vmem:[%s251 + $0xd0] sm:$0xff]
        %v323 = vld [vmem:[%s251 + $0xd8] sm:$0xff]
        %v324 = vld [vmem:[%s251 + $0xe0] sm:$0xff]
        %v325 = vld [vmem:[%s251 + $0xe8] sm:$0xff]
        %v326 = vld [vmem:[%s251 + $0xf0] sm:$0xff]
        %v327 = vld [vmem:[%s251 + $0xf8] sm:$0xff]
        %v328 = vpack.c.bf16 %v298, %v296
        %v329 = vpack.c.bf16 %v299, %v297
        %v330 = vpack.c.bf16 %v302, %v300
        %v331 = vpack.c.bf16 %v303, %v301
        %v332 = vpack.c.bf16 %v306, %v304
        %v333 = vpack.c.bf16 %v307, %v305
        %v334 = vpack.c.bf16 %v310, %v308
        %v335 = vpack.c.bf16 %v311, %v309
        %v336 = vpack.c.bf16 %v314, %v312
        %v337 = vpack.c.bf16 %v315, %v313
        %v338 = vpack.c.bf16 %v318, %v316
        %v339 = vpack.c.bf16 %v319, %v317
        %v340 = vpack.c.bf16 %v322, %v320
        %v341 = vpack.c.bf16 %v323, %v321
        %v342 = vpack.c.bf16 %v326, %v324
        %v343 = vpack.c.bf16 %v327, %v325
        %v344 = vld [vmem:[#allocation5] sm:$0xff]
        %v345 = vld [vmem:[#allocation5 + $0x8] sm:$0xff]
        %v346 = vld [vmem:[#allocation5 + $0x10] sm:$0xff]
        %v347 = vld [vmem:[#allocation5 + $0x18] sm:$0xff]
        %v348 = vld [vmem:[#allocation5 + $0x20] sm:$0xff]
        %v349 = vld [vmem:[#allocation5 + $0x28] sm:$0xff]
        %v350 = vld [vmem:[#allocation5 + $0x30] sm:$0xff]
        %v351 = vld [vmem:[#allocation5 + $0x38] sm:$0xff]
        %v352 = vld [vmem:[#allocation5 + $0x40] sm:$0xff]
        %v353 = vld [vmem:[#allocation5 + $0x48] sm:$0xff]
        %v354 = vld [vmem:[#allocation5 + $0x50] sm:$0xff]
        %v355 = vld [vmem:[#allocation5 + $0x58] sm:$0xff]
        %v356 = vld [vmem:[#allocation5 + $0x60] sm:$0xff]
        %v357 = vld [vmem:[#allocation5 + $0x68] sm:$0xff]
        %v358 = vld [vmem:[#allocation5 + $0x70] sm:$0xff]
        %v359 = vld [vmem:[#allocation5 + $0x78] sm:$0xff]
        %v360 = vld [vmem:[#allocation5 + $0x80] sm:$0xff]
        %v361 = vld [vmem:[#allocation5 + $0x88] sm:$0xff]
        %v362 = vld [vmem:[#allocation5 + $0x90] sm:$0xff]
        %v363 = vld [vmem:[#allocation5 + $0x98] sm:$0xff]
        %v364 = vld [vmem:[#allocation5 + $0xa0] sm:$0xff]
        %v365 = vld [vmem:[#allocation5 + $0xa8] sm:$0xff]
        %v366 = vld [vmem:[#allocation5 + $0xb0] sm:$0xff]
        %v367 = vld [vmem:[#allocation5 + $0xb8] sm:$0xff]
        %v368 = vld [vmem:[#allocation5 + $0xc0] sm:$0xff]
        %v369 = vld [vmem:[#allocation5 + $0xc8] sm:$0xff]
        %v370 = vld [vmem:[#allocation5 + $0xd0] sm:$0xff]
        %v371 = vld [vmem:[#allocation5 + $0xd8] sm:$0xff]
        %v372 = vld [vmem:[#allocation5 + $0xe0] sm:$0xff]
        %v373 = vld [vmem:[#allocation5 + $0xe8] sm:$0xff]
        %v374 = vld [vmem:[#allocation5 + $0xf0] sm:$0xff]
        %v375 = vld [vmem:[#allocation5 + $0xf8] sm:$0xff]
        %v376 = vld [vmem:[#allocation7] sm:$0x3]
        %v378 = vperm.slane %v376, 0
        %v379 = vperm.slane %v376, 1
        %v414 = vunpack.c.l.b16 %v344
        %v415 = vunpack.c.h.b16 %v344
        %v416 = vunpack.c.l.b16 %v345
        %v417 = vunpack.c.h.b16 %v345
        %v418 = vunpack.c.l.b16 %v346
        %v419 = vunpack.c.h.b16 %v346
        %v420 = vunpack.c.l.b16 %v347
        %v421 = vunpack.c.h.b16 %v347
        %v422 = vunpack.c.l.b16 %v348
        %v423 = vunpack.c.h.b16 %v348
        %v424 = vunpack.c.l.b16 %v349
        %v425 = vunpack.c.h.b16 %v349
        %v426 = vunpack.c.l.b16 %v350
        %v427 = vunpack.c.h.b16 %v350
        %v428 = vunpack.c.l.b16 %v351
        %v429 = vunpack.c.h.b16 %v351
        %v430 = vunpack.c.l.b16 %v352
        %v431 = vunpack.c.h.b16 %v352
        %v432 = vunpack.c.l.b16 %v353
        %v433 = vunpack.c.h.b16 %v353
        %v434 = vunpack.c.l.b16 %v354
        %v435 = vunpack.c.h.b16 %v354
        %v436 = vunpack.c.l.b16 %v355
        %v437 = vunpack.c.h.b16 %v355
        %v438 = vunpack.c.l.b16 %v356
        %v439 = vunpack.c.h.b16 %v356
        %v440 = vunpack.c.l.b16 %v357
        %v441 = vunpack.c.h.b16 %v357
        %v442 = vunpack.c.l.b16 %v358
        %v443 = vunpack.c.h.b16 %v358
        %v444 = vunpack.c.l.b16 %v359
        %v445 = vunpack.c.h.b16 %v359
        %v446 = vunpack.c.l.b16 %v360
        %v447 = vunpack.c.h.b16 %v360
        %v448 = vunpack.c.l.b16 %v361
        %v449 = vunpack.c.h.b16 %v361
        %v450 = vunpack.c.l.b16 %v362
        %v451 = vunpack.c.h.b16 %v362
        %v452 = vunpack.c.l.b16 %v363
        %v453 = vunpack.c.h.b16 %v363
        %v454 = vunpack.c.l.b16 %v364
        %v455 = vunpack.c.h.b16 %v364
        %v456 = vunpack.c.l.b16 %v365
        %v457 = vunpack.c.h.b16 %v365
        %v458 = vunpack.c.l.b16 %v366
        %v459 = vunpack.c.h.b16 %v366
        %v460 = vunpack.c.l.b16 %v367
        %v461 = vunpack.c.h.b16 %v367
        %v462 = vunpack.c.l.b16 %v368
        %v463 = vunpack.c.h.b16 %v368
        %v464 = vunpack.c.l.b16 %v369
        %v465 = vunpack.c.h.b16 %v369
        %v466 = vunpack.c.l.b16 %v370
        %v467 = vunpack.c.h.b16 %v370
        %v468 = vunpack.c.l.b16 %v371
        %v469 = vunpack.c.h.b16 %v371
        %v470 = vunpack.c.l.b16 %v372
        %v471 = vunpack.c.h.b16 %v372
        %v472 = vunpack.c.l.b16 %v373
        %v473 = vunpack.c.h.b16 %v373
        %v474 = vunpack.c.l.b16 %v374
        %v475 = vunpack.c.h.b16 %v374
        %v476 = vunpack.c.l.b16 %v375
        %v477 = vunpack.c.h.b16 %v375
        %v478 = vpack.c.b16 %v416, %v414
        %v479 = vpack.c.b16 %v417, %v415
        %v480 = vpack.c.b16 %v420, %v418
        %v481 = vpack.c.b16 %v421, %v419
        %v482 = vpack.c.b16 %v424, %v422
        %v483 = vpack.c.b16 %v425, %v423
        %v484 = vpack.c.b16 %v428, %v426
        %v485 = vpack.c.b16 %v429, %v427
        %v486 = vpack.c.b16 %v432, %v430
        %v487 = vpack.c.b16 %v433, %v431
        %v488 = vpack.c.b16 %v436, %v434
        %v489 = vpack.c.b16 %v437, %v435
        %v490 = vpack.c.b16 %v440, %v438
        %v491 = vpack.c.b16 %v441, %v439
        %v492 = vpack.c.b16 %v444, %v442
        %v493 = vpack.c.b16 %v445, %v443
        %v494 = vpack.c.b16 %v448, %v446
        %v495 = vpack.c.b16 %v449, %v447
        %v496 = vpack.c.b16 %v452, %v450
        %v497 = vpack.c.b16 %v453, %v451
        %v498 = vpack.c.b16 %v456, %v454
        %v499 = vpack.c.b16 %v457, %v455
        %v500 = vpack.c.b16 %v460, %v458
        %v501 = vpack.c.b16 %v461, %v459
        %v502 = vpack.c.b16 %v464, %v462
        %v503 = vpack.c.b16 %v465, %v463
        %v504 = vpack.c.b16 %v468, %v466
        %v505 = vpack.c.b16 %v469, %v467
        %v506 = vpack.c.b16 %v472, %v470
        %v507 = vpack.c.b16 %v473, %v471
        %v508 = vpack.c.b16 %v476, %v474
        %v509 = vpack.c.b16 %v477, %v475
        %542 = vmatpush.bf16.msra.mxu0 %v492
        %543 = vmatpush.bf16.msra.mxu0 %v490
        %544 = vmatpush.bf16.msra.mxu0 %v488
        %545 = vmatpush.bf16.msra.mxu0 %v486
        %546 = vmatpush.bf16.msra.mxu0 %v484
        %547 = vmatpush.bf16.msra.mxu0 %v482
        %548 = vmatpush.bf16.msra.mxu0 %v480
        %549 = vmatpush.bf16.msra.mxu0 %v478
        %550 = vmatmul.bf16.gmra.mxu0 %v328
        %v551 = vpop.f32.mrf.mxu0
        %v552 = vadd.f32 %v378, %v551
        %v553 = vpop.f32.mrf.mxu0
        %v554 = vadd.f32 %v378, %v553
        %555 = vmatmul.bf16.gmra.mxu0 %v330
        %v556 = vpop.f32.mrf.mxu0
        %v557 = vadd.f32 %v378, %v556
        %v558 = vpop.f32.mrf.mxu0
        %v559 = vadd.f32 %v378, %v558
        %560 = vmatmul.bf16.gmra.mxu0 %v332
        %v561 = vpop.f32.mrf.mxu0
        %v562 = vadd.f32 %v378, %v561
        %v563 = vpop.f32.mrf.mxu0
        %v564 = vadd.f32 %v378, %v563
        %565 = vmatmul.bf16.gmra.mxu0 %v334
        %v566 = vpop.f32.mrf.mxu0
        %v567 = vadd.f32 %v378, %v566
        %v568 = vpop.f32.mrf.mxu0
        %v569 = vadd.f32 %v378, %v568
        %570 = vmatmul.bf16.gmra.mxu0 %v336
        %v571 = vpop.f32.mrf.mxu0
        %v572 = vadd.f32 %v378, %v571
        %v573 = vpop.f32.mrf.mxu0
        %v574 = vadd.f32 %v378, %v573
        %575 = vmatmul.bf16.gmra.mxu0 %v338
        %v576 = vpop.f32.mrf.mxu0
        %v577 = vadd.f32 %v378, %v576
        %v578 = vpop.f32.mrf.mxu0
        %v579 = vadd.f32 %v378, %v578
        %580 = vmatmul.bf16.gmra.mxu0 %v340
        %v581 = vpop.f32.mrf.mxu0
        %v582 = vadd.f32 %v378, %v581
        %v583 = vpop.f32.mrf.mxu0
        %v584 = vadd.f32 %v378, %v583
        %585 = vmatmul.bf16.gmra.mxu0 %v342
        %v586 = vpop.f32.mrf.mxu0
        %v587 = vadd.f32 %v378, %v586
        %v588 = vpop.f32.mrf.mxu0
        %v589 = vadd.f32 %v378, %v588
        %590 = vdwg.mxu0
        %591 = vmatpush.bf16.msra.mxu0 %v508
        %592 = vmatpush.bf16.msra.mxu0 %v506
        %593 = vmatpush.bf16.msra.mxu0 %v504
        %594 = vmatpush.bf16.msra.mxu0 %v502
        %595 = vmatpush.bf16.msra.mxu0 %v500
        %596 = vmatpush.bf16.msra.mxu0 %v498
        %597 = vmatpush.bf16.msra.mxu0 %v496
        %598 = vmatpush.bf16.msra.mxu0 %v494
        %599 = vmatmul.bf16.gmra.mxu0 %v329
        %v600 = vpop.f32.mrf.mxu0
        %v601 = vadd.f32 %v552, %v600
        %v602 = vpop.f32.mrf.mxu0
        %v603 = vadd.f32 %v554, %v602
        %604 = vmatmul.bf16.gmra.mxu0 %v331
        %v605 = vpop.f32.mrf.mxu0
        %v606 = vadd.f32 %v557, %v605
        %v607 = vpop.f32.mrf.mxu0
        %v608 = vadd.f32 %v559, %v607
        %609 = vmatmul.bf16.gmra.mxu0 %v333
        %v610 = vpop.f32.mrf.mxu0
        %v611 = vadd.f32 %v562, %v610
        %v612 = vpop.f32.mrf.mxu0
        %v613 = vadd.f32 %v564, %v612
        %614 = vmatmul.bf16.gmra.mxu0 %v335
        %v615 = vpop.f32.mrf.mxu0
        %v616 = vadd.f32 %v567, %v615
        %v617 = vpop.f32.mrf.mxu0
        %v618 = vadd.f32 %v569, %v617
        %619 = vmatmul.bf16.gmra.mxu0 %v337
        %v620 = vpop.f32.mrf.mxu0
        %v621 = vadd.f32 %v572, %v620
        %v622 = vpop.f32.mrf.mxu0
        %v623 = vadd.f32 %v574, %v622
        %624 = vmatmul.bf16.gmra.mxu0 %v339
        %v625 = vpop.f32.mrf.mxu0
        %v626 = vadd.f32 %v577, %v625
        %v627 = vpop.f32.mrf.mxu0
        %v628 = vadd.f32 %v579, %v627
        %629 = vmatmul.bf16.gmra.mxu0 %v341
        %v630 = vpop.f32.mrf.mxu0
        %v631 = vadd.f32 %v582, %v630
        %v632 = vpop.f32.mrf.mxu0
        %v633 = vadd.f32 %v584, %v632
        %634 = vmatmul.bf16.gmra.mxu0 %v343
        %v635 = vpop.f32.mrf.mxu0
        %v636 = vadd.f32 %v587, %v635
        %v637 = vpop.f32.mrf.mxu0
        %v638 = vadd.f32 %v589, %v637
        %639 = vdwg.mxu0
        %640 = vmatpush.bf16.msra.mxu0 %v493
        %641 = vmatpush.bf16.msra.mxu0 %v491
        %642 = vmatpush.bf16.msra.mxu0 %v489
        %643 = vmatpush.bf16.msra.mxu0 %v487
        %644 = vmatpush.bf16.msra.mxu0 %v485
        %645 = vmatpush.bf16.msra.mxu0 %v483
        %646 = vmatpush.bf16.msra.mxu0 %v481
        %647 = vmatpush.bf16.msra.mxu0 %v479
        %648 = vmatmul.bf16.gmra.mxu0 %v328
        %v649 = vpop.f32.mrf.mxu0
        %v650 = vadd.f32 %v379, %v649
        %v651 = vpop.f32.mrf.mxu0
        %v652 = vadd.f32 %v379, %v651
        %653 = vmatmul.bf16.gmra.mxu0 %v330
        %v654 = vpop.f32.mrf.mxu0
        %v655 = vadd.f32 %v379, %v654
        %v656 = vpop.f32.mrf.mxu0
        %v657 = vadd.f32 %v379, %v656
        %658 = vmatmul.bf16.gmra.mxu0 %v332
        %v659 = vpop.f32.mrf.mxu0
        %v660 = vadd.f32 %v379, %v659
        %v661 = vpop.f32.mrf.mxu0
        %v662 = vadd.f32 %v379, %v661
        %663 = vmatmul.bf16.gmra.mxu0 %v334
        %v664 = vpop.f32.mrf.mxu0
        %v665 = vadd.f32 %v379, %v664
        %v666 = vpop.f32.mrf.mxu0
        %v667 = vadd.f32 %v379, %v666
        %668 = vmatmul.bf16.gmra.mxu0 %v336
        %v669 = vpop.f32.mrf.mxu0
        %v670 = vadd.f32 %v379, %v669
        %v671 = vpop.f32.mrf.mxu0
        %v672 = vadd.f32 %v379, %v671
        %673 = vmatmul.bf16.gmra.mxu0 %v338
        %v674 = vpop.f32.mrf.mxu0
        %v675 = vadd.f32 %v379, %v674
        %v676 = vpop.f32.mrf.mxu0
        %v677 = vadd.f32 %v379, %v676
        %678 = vmatmul.bf16.gmra.mxu0 %v340
        %v679 = vpop.f32.mrf.mxu0
        %v680 = vadd.f32 %v379, %v679
        %v681 = vpop.f32.mrf.mxu0
        %v682 = vadd.f32 %v379, %v681
        %683 = vmatmul.bf16.gmra.mxu0 %v342
        %v684 = vpop.f32.mrf.mxu0
        %v685 = vadd.f32 %v379, %v684
        %v686 = vpop.f32.mrf.mxu0
        %v687 = vadd.f32 %v379, %v686
        %688 = vdwg.mxu0
        %689 = vmatpush.bf16.msra.mxu0 %v509
        %690 = vmatpush.bf16.msra.mxu0 %v507
        %691 = vmatpush.bf16.msra.mxu0 %v505
        %692 = vmatpush.bf16.msra.mxu0 %v503
        %693 = vmatpush.bf16.msra.mxu0 %v501
        %694 = vmatpush.bf16.msra.mxu0 %v499
        %695 = vmatpush.bf16.msra.mxu0 %v497
        %696 = vmatpush.bf16.msra.mxu0 %v495
        %697 = vmatmul.bf16.gmra.mxu0 %v329
        %v698 = vpop.f32.mrf.mxu0
        %v699 = vadd.f32 %v650, %v698
        %v700 = vpop.f32.mrf.mxu0
        %v701 = vadd.f32 %v652, %v700
        %702 = vmatmul.bf16.gmra.mxu0 %v331
        %v703 = vpop.f32.mrf.mxu0
        %v704 = vadd.f32 %v655, %v703
        %v705 = vpop.f32.mrf.mxu0
        %v706 = vadd.f32 %v657, %v705
        %707 = vmatmul.bf16.gmra.mxu0 %v333
        %v708 = vpop.f32.mrf.mxu0
        %v709 = vadd.f32 %v660, %v708
        %v710 = vpop.f32.mrf.mxu0
        %v711 = vadd.f32 %v662, %v710
        %712 = vmatmul.bf16.gmra.mxu0 %v335
        %v713 = vpop.f32.mrf.mxu0
        %v714 = vadd.f32 %v665, %v713
        %v715 = vpop.f32.mrf.mxu0
        %v716 = vadd.f32 %v667, %v715
        %717 = vmatmul.bf16.gmra.mxu0 %v337
        %v718 = vpop.f32.mrf.mxu0
        %v719 = vadd.f32 %v670, %v718
        %v720 = vpop.f32.mrf.mxu0
        %v721 = vadd.f32 %v672, %v720
        %722 = vmatmul.bf16.gmra.mxu0 %v339
        %v723 = vpop.f32.mrf.mxu0
        %v724 = vadd.f32 %v675, %v723
        %v725 = vpop.f32.mrf.mxu0
        %v726 = vadd.f32 %v677, %v725
        %727 = vmatmul.bf16.gmra.mxu0 %v341
        %v728 = vpop.f32.mrf.mxu0
        %v729 = vadd.f32 %v680, %v728
        %v730 = vpop.f32.mrf.mxu0
        %v731 = vadd.f32 %v682, %v730
        %732 = vmatmul.bf16.gmra.mxu0 %v343
        %v733 = vpop.f32.mrf.mxu0
        %v734 = vadd.f32 %v685, %v733
        %v735 = vpop.f32.mrf.mxu0
        %v736 = vadd.f32 %v687, %v735
        %737 = vdwg.mxu0
        %v738 = vmax.f32 %v601, 0.0
        %v739 = vmax.f32 %v699, 0.0
        %v740 = vmax.f32 %v603, 0.0
        %v741 = vmax.f32 %v701, 0.0
        %v742 = vmax.f32 %v606, 0.0
        %v743 = vmax.f32 %v704, 0.0
        %v744 = vmax.f32 %v608, 0.0
        %v745 = vmax.f32 %v706, 0.0
        %v746 = vmax.f32 %v611, 0.0
        %v747 = vmax.f32 %v709, 0.0
        %v748 = vmax.f32 %v613, 0.0
        %v749 = vmax.f32 %v711, 0.0
        %v750 = vmax.f32 %v616, 0.0
        %v751 = vmax.f32 %v714, 0.0
        %v752 = vmax.f32 %v618, 0.0
        %v753 = vmax.f32 %v716, 0.0
        %v754 = vmax.f32 %v621, 0.0
        %v755 = vmax.f32 %v719, 0.0
        %v756 = vmax.f32 %v623, 0.0
        %v757 = vmax.f32 %v721, 0.0
        %v758 = vmax.f32 %v626, 0.0
        %v759 = vmax.f32 %v724, 0.0
        %v760 = vmax.f32 %v628, 0.0
        %v761 = vmax.f32 %v726, 0.0
        %v762 = vmax.f32 %v631, 0.0
        %v763 = vmax.f32 %v729, 0.0
        %v764 = vmax.f32 %v633, 0.0
        %v765 = vmax.f32 %v731, 0.0
        %v766 = vmax.f32 %v636, 0.0
        %v767 = vmax.f32 %v734, 0.0
        %v768 = vmax.f32 %v638, 0.0
        %v769 = vmax.f32 %v736, 0.0
        %v770 = vpack.c.bf16 %v740, %v738
        %v771 = vpack.c.bf16 %v741, %v739
        %v772 = vpack.c.bf16 %v744, %v742
        %v773 = vpack.c.bf16 %v745, %v743
        %v774 = vpack.c.bf16 %v748, %v746
        %v775 = vpack.c.bf16 %v749, %v747
        %v776 = vpack.c.bf16 %v752, %v750
        %v777 = vpack.c.bf16 %v753, %v751
        %v778 = vpack.c.bf16 %v756, %v754
        %v779 = vpack.c.bf16 %v757, %v755
        %v780 = vpack.c.bf16 %v760, %v758
        %v781 = vpack.c.bf16 %v761, %v759
        %v782 = vpack.c.bf16 %v764, %v762
        %v783 = vpack.c.bf16 %v765, %v763
        %v784 = vpack.c.bf16 %v768, %v766
        %v785 = vpack.c.bf16 %v769, %v767
        %v786 = vld [vmem:[#allocation8] sm:$0xff]
        %v787 = vld [vmem:[#allocation8 + $0x8] sm:$0xff]
        %v788 = vld [vmem:[#allocation8 + $0x10] sm:$0xff]
        %v789 = vld [vmem:[#allocation8 + $0x18] sm:$0xff]
        %v790 = vld [vmem:[#allocation8 + $0x20] sm:$0xff]
        %v791 = vld [vmem:[#allocation8 + $0x28] sm:$0xff]
        %v792 = vld [vmem:[#allocation8 + $0x30] sm:$0xff]
        %v793 = vld [vmem:[#allocation8 + $0x38] sm:$0xff]
        %v794 = vld [vmem:[#allocation8 + $0x40] sm:$0xff]
        %v795 = vld [vmem:[#allocation8 + $0x48] sm:$0xff]
        %v796 = vld [vmem:[#allocation8 + $0x50] sm:$0xff]
        %v797 = vld [vmem:[#allocation8 + $0x58] sm:$0xff]
        %v798 = vld [vmem:[#allocation8 + $0x60] sm:$0xff]
        %v799 = vld [vmem:[#allocation8 + $0x68] sm:$0xff]
        %v800 = vld [vmem:[#allocation8 + $0x70] sm:$0xff]
        %v801 = vld [vmem:[#allocation8 + $0x78] sm:$0xff]
        %v802 = vld [vmem:[#allocation8 + $0x80] sm:$0xff]
        %v803 = vld [vmem:[#allocation8 + $0x88] sm:$0xff]
        %v804 = vld [vmem:[#allocation8 + $0x90] sm:$0xff]
        %v805 = vld [vmem:[#allocation8 + $0x98] sm:$0xff]
        %v806 = vld [vmem:[#allocation8 + $0xa0] sm:$0xff]
        %v807 = vld [vmem:[#allocation8 + $0xa8] sm:$0xff]
        %v808 = vld [vmem:[#allocation8 + $0xb0] sm:$0xff]
        %v809 = vld [vmem:[#allocation8 + $0xb8] sm:$0xff]
        %v810 = vld [vmem:[#allocation8 + $0xc0] sm:$0xff]
        %v811 = vld [vmem:[#allocation8 + $0xc8] sm:$0xff]
        %v812 = vld [vmem:[#allocation8 + $0xd0] sm:$0xff]
        %v813 = vld [vmem:[#allocation8 + $0xd8] sm:$0xff]
        %v814 = vld [vmem:[#allocation8 + $0xe0] sm:$0xff]
        %v815 = vld [vmem:[#allocation8 + $0xe8] sm:$0xff]
        %v816 = vld [vmem:[#allocation8 + $0xf0] sm:$0xff]
        %v817 = vld [vmem:[#allocation8 + $0xf8] sm:$0xff]
        %v818 = vld [vmem:[%s4] sm:$0x3]
        %v820 = vperm.slane %v818, 0
        %v821 = vperm.slane %v818, 1
        %v856 = vunpack.c.l.b16 %v786
        %v857 = vunpack.c.h.b16 %v786
        %v858 = vunpack.c.l.b16 %v787
        %v859 = vunpack.c.h.b16 %v787
        %v860 = vunpack.c.l.b16 %v788
        %v861 = vunpack.c.h.b16 %v788
        %v862 = vunpack.c.l.b16 %v789
        %v863 = vunpack.c.h.b16 %v789
        %v864 = vunpack.c.l.b16 %v790
        %v865 = vunpack.c.h.b16 %v790
        %v866 = vunpack.c.l.b16 %v791
        %v867 = vunpack.c.h.b16 %v791
        %v868 = vunpack.c.l.b16 %v792
        %v869 = vunpack.c.h.b16 %v792
        %v870 = vunpack.c.l.b16 %v793
        %v871 = vunpack.c.h.b16 %v793
        %v872 = vunpack.c.l.b16 %v794
        %v873 = vunpack.c.h.b16 %v794
        %v874 = vunpack.c.l.b16 %v795
        %v875 = vunpack.c.h.b16 %v795
        %v876 = vunpack.c.l.b16 %v796
        %v877 = vunpack.c.h.b16 %v796
        %v878 = vunpack.c.l.b16 %v797
        %v879 = vunpack.c.h.b16 %v797
        %v880 = vunpack.c.l.b16 %v798
        %v881 = vunpack.c.h.b16 %v798
        %v882 = vunpack.c.l.b16 %v799
        %v883 = vunpack.c.h.b16 %v799
        %v884 = vunpack.c.l.b16 %v800
        %v885 = vunpack.c.h.b16 %v800
        %v886 = vunpack.c.l.b16 %v801
        %v887 = vunpack.c.h.b16 %v801
        %v888 = vunpack.c.l.b16 %v802
        %v889 = vunpack.c.h.b16 %v802
        %v890 = vunpack.c.l.b16 %v803
        %v891 = vunpack.c.h.b16 %v803
        %v892 = vunpack.c.l.b16 %v804
        %v893 = vunpack.c.h.b16 %v804
        %v894 = vunpack.c.l.b16 %v805
        %v895 = vunpack.c.h.b16 %v805
        %v896 = vunpack.c.l.b16 %v806
        %v897 = vunpack.c.h.b16 %v806
        %v898 = vunpack.c.l.b16 %v807
        %v899 = vunpack.c.h.b16 %v807
        %v900 = vunpack.c.l.b16 %v808
        %v901 = vunpack.c.h.b16 %v808
        %v902 = vunpack.c.l.b16 %v809
        %v903 = vunpack.c.h.b16 %v809
        %v904 = vunpack.c.l.b16 %v810
        %v905 = vunpack.c.h.b16 %v810
        %v906 = vunpack.c.l.b16 %v811
        %v907 = vunpack.c.h.b16 %v811
        %v908 = vunpack.c.l.b16 %v812
        %v909 = vunpack.c.h.b16 %v812
        %v910 = vunpack.c.l.b16 %v813
        %v911 = vunpack.c.h.b16 %v813
        %v912 = vunpack.c.l.b16 %v814
        %v913 = vunpack.c.h.b16 %v814
        %v914 = vunpack.c.l.b16 %v815
        %v915 = vunpack.c.h.b16 %v815
        %v916 = vunpack.c.l.b16 %v816
        %v917 = vunpack.c.h.b16 %v816
        %v918 = vunpack.c.l.b16 %v817
        %v919 = vunpack.c.h.b16 %v817
        %v920 = vpack.c.b16 %v858, %v856
        %v921 = vpack.c.b16 %v859, %v857
        %v922 = vpack.c.b16 %v862, %v860
        %v923 = vpack.c.b16 %v863, %v861
        %v924 = vpack.c.b16 %v866, %v864
        %v925 = vpack.c.b16 %v867, %v865
        %v926 = vpack.c.b16 %v870, %v868
        %v927 = vpack.c.b16 %v871, %v869
        %v928 = vpack.c.b16 %v874, %v872
        %v929 = vpack.c.b16 %v875, %v873
        %v930 = vpack.c.b16 %v878, %v876
        %v931 = vpack.c.b16 %v879, %v877
        %v932 = vpack.c.b16 %v882, %v880
        %v933 = vpack.c.b16 %v883, %v881
        %v934 = vpack.c.b16 %v886, %v884
        %v935 = vpack.c.b16 %v887, %v885
        %v936 = vpack.c.b16 %v890, %v888
        %v937 = vpack.c.b16 %v891, %v889
        %v938 = vpack.c.b16 %v894, %v892
        %v939 = vpack.c.b16 %v895, %v893
        %v940 = vpack.c.b16 %v898, %v896
        %v941 = vpack.c.b16 %v899, %v897
        %v942 = vpack.c.b16 %v902, %v900
        %v943 = vpack.c.b16 %v903, %v901
        %v944 = vpack.c.b16 %v906, %v904
        %v945 = vpack.c.b16 %v907, %v905
        %v946 = vpack.c.b16 %v910, %v908
        %v947 = vpack.c.b16 %v911, %v909
        %v948 = vpack.c.b16 %v914, %v912
        %v949 = vpack.c.b16 %v915, %v913
        %v950 = vpack.c.b16 %v918, %v916
        %v951 = vpack.c.b16 %v919, %v917
        %984 = vmatpush.bf16.msra.mxu0 %v934
        %985 = vmatpush.bf16.msra.mxu0 %v932
        %986 = vmatpush.bf16.msra.mxu0 %v930
        %987 = vmatpush.bf16.msra.mxu0 %v928
        %988 = vmatpush.bf16.msra.mxu0 %v926
        %989 = vmatpush.bf16.msra.mxu0 %v924
        %990 = vmatpush.bf16.msra.mxu0 %v922
        %991 = vmatpush.bf16.msra.mxu0 %v920
        %992 = vmatmul.bf16.gmra.mxu0 %v770
        %v993 = vpop.f32.mrf.mxu0
        %v994 = vadd.f32 %v820, %v993
        %v995 = vpop.f32.mrf.mxu0
        %v996 = vadd.f32 %v820, %v995
        %997 = vmatmul.bf16.gmra.mxu0 %v772
        %v998 = vpop.f32.mrf.mxu0
        %v999 = vadd.f32 %v820, %v998
        %v1000 = vpop.f32.mrf.mxu0
        %v1001 = vadd.f32 %v820, %v1000
        %1002 = vmatmul.bf16.gmra.mxu0 %v774
        %v1003 = vpop.f32.mrf.mxu0
        %v1004 = vadd.f32 %v820, %v1003
        %v1005 = vpop.f32.mrf.mxu0
        %v1006 = vadd.f32 %v820, %v1005
        %1007 = vmatmul.bf16.gmra.mxu0 %v776
        %v1008 = vpop.f32.mrf.mxu0
        %v1009 = vadd.f32 %v820, %v1008
        %v1010 = vpop.f32.mrf.mxu0
        %v1011 = vadd.f32 %v820, %v1010
        %1012 = vmatmul.bf16.gmra.mxu0 %v778
        %v1013 = vpop.f32.mrf.mxu0
        %v1014 = vadd.f32 %v820, %v1013
        %v1015 = vpop.f32.mrf.mxu0
        %v1016 = vadd.f32 %v820, %v1015
        %1017 = vmatmul.bf16.gmra.mxu0 %v780
        %v1018 = vpop.f32.mrf.mxu0
        %v1019 = vadd.f32 %v820, %v1018
        %v1020 = vpop.f32.mrf.mxu0
        %v1021 = vadd.f32 %v820, %v1020
        %1022 = vmatmul.bf16.gmra.mxu0 %v782
        %v1023 = vpop.f32.mrf.mxu0
        %v1024 = vadd.f32 %v820, %v1023
        %v1025 = vpop.f32.mrf.mxu0
        %v1026 = vadd.f32 %v820, %v1025
        %1027 = vmatmul.bf16.gmra.mxu0 %v784
        %v1028 = vpop.f32.mrf.mxu0
        %v1029 = vadd.f32 %v820, %v1028
        %v1030 = vpop.f32.mrf.mxu0
        %v1031 = vadd.f32 %v820, %v1030
        %1032 = vdwg.mxu0
        %1033 = vmatpush.bf16.msra.mxu0 %v950
        %1034 = vmatpush.bf16.msra.mxu0 %v948
        %1035 = vmatpush.bf16.msra.mxu0 %v946
        %1036 = vmatpush.bf16.msra.mxu0 %v944
        %1037 = vmatpush.bf16.msra.mxu0 %v942
        %1038 = vmatpush.bf16.msra.mxu0 %v940
        %1039 = vmatpush.bf16.msra.mxu0 %v938
        %1040 = vmatpush.bf16.msra.mxu0 %v936
        %1041 = vmatmul.bf16.gmra.mxu0 %v771
        %v1042 = vpop.f32.mrf.mxu0
        %v1043 = vadd.f32 %v994, %v1042
        %v1044 = vpop.f32.mrf.mxu0
        %v1045 = vadd.f32 %v996, %v1044
        %1046 = vmatmul.bf16.gmra.mxu0 %v773
        %v1047 = vpop.f32.mrf.mxu0
        %v1048 = vadd.f32 %v999, %v1047
        %v1049 = vpop.f32.mrf.mxu0
        %v1050 = vadd.f32 %v1001, %v1049
        %1051 = vmatmul.bf16.gmra.mxu0 %v775
        %v1052 = vpop.f32.mrf.mxu0
        %v1053 = vadd.f32 %v1004, %v1052
        %v1054 = vpop.f32.mrf.mxu0
        %v1055 = vadd.f32 %v1006, %v1054
        %1056 = vmatmul.bf16.gmra.mxu0 %v777
        %v1057 = vpop.f32.mrf.mxu0
        %v1058 = vadd.f32 %v1009, %v1057
        %v1059 = vpop.f32.mrf.mxu0
        %v1060 = vadd.f32 %v1011, %v1059
        %1061 = vmatmul.bf16.gmra.mxu0 %v779
        %v1062 = vpop.f32.mrf.mxu0
        %v1063 = vadd.f32 %v1014, %v1062
        %v1064 = vpop.f32.mrf.mxu0
        %v1065 = vadd.f32 %v1016, %v1064
        %1066 = vmatmul.bf16.gmra.mxu0 %v781
        %v1067 = vpop.f32.mrf.mxu0
        %v1068 = vadd.f32 %v1019, %v1067
        %v1069 = vpop.f32.mrf.mxu0
        %v1070 = vadd.f32 %v1021, %v1069
        %1071 = vmatmul.bf16.gmra.mxu0 %v783
        %v1072 = vpop.f32.mrf.mxu0
        %v1073 = vadd.f32 %v1024, %v1072
        %v1074 = vpop.f32.mrf.mxu0
        %v1075 = vadd.f32 %v1026, %v1074
        %1076 = vmatmul.bf16.gmra.mxu0 %v785
        %v1077 = vpop.f32.mrf.mxu0
        %v1078 = vadd.f32 %v1029, %v1077
        %v1079 = vpop.f32.mrf.mxu0
        %v1080 = vadd.f32 %v1031, %v1079
        %1081 = vdwg.mxu0
        %1082 = vmatpush.bf16.msra.mxu0 %v935
        %1083 = vmatpush.bf16.msra.mxu0 %v933
        %1084 = vmatpush.bf16.msra.mxu0 %v931
        %1085 = vmatpush.bf16.msra.mxu0 %v929
        %1086 = vmatpush.bf16.msra.mxu0 %v927
        %1087 = vmatpush.bf16.msra.mxu0 %v925
        %1088 = vmatpush.bf16.msra.mxu0 %v923
        %1089 = vmatpush.bf16.msra.mxu0 %v921
        %1090 = vmatmul.bf16.gmra.mxu0 %v770
        %v1091 = vpop.f32.mrf.mxu0
        %v1092 = vadd.f32 %v821, %v1091
        %v1093 = vpop.f32.mrf.mxu0
        %v1094 = vadd.f32 %v821, %v1093
        %1095 = vmatmul.bf16.gmra.mxu0 %v772
        %v1096 = vpop.f32.mrf.mxu0
        %v1097 = vadd.f32 %v821, %v1096
        %v1098 = vpop.f32.mrf.mxu0
        %v1099 = vadd.f32 %v821, %v1098
        %1100 = vmatmul.bf16.gmra.mxu0 %v774
        %v1101 = vpop.f32.mrf.mxu0
        %v1102 = vadd.f32 %v821, %v1101
        %v1103 = vpop.f32.mrf.mxu0
        %v1104 = vadd.f32 %v821, %v1103
        %1105 = vmatmul.bf16.gmra.mxu0 %v776
        %v1106 = vpop.f32.mrf.mxu0
        %v1107 = vadd.f32 %v821, %v1106
        %v1108 = vpop.f32.mrf.mxu0
        %v1109 = vadd.f32 %v821, %v1108
        %1110 = vmatmul.bf16.gmra.mxu0 %v778
        %v1111 = vpop.f32.mrf.mxu0
        %v1112 = vadd.f32 %v821, %v1111
        %v1113 = vpop.f32.mrf.mxu0
        %v1114 = vadd.f32 %v821, %v1113
        %1115 = vmatmul.bf16.gmra.mxu0 %v780
        %v1116 = vpop.f32.mrf.mxu0
        %v1117 = vadd.f32 %v821, %v1116
        %v1118 = vpop.f32.mrf.mxu0
        %v1119 = vadd.f32 %v821, %v1118
        %1120 = vmatmul.bf16.gmra.mxu0 %v782
        %v1121 = vpop.f32.mrf.mxu0
        %v1122 = vadd.f32 %v821, %v1121
        %v1123 = vpop.f32.mrf.mxu0
        %v1124 = vadd.f32 %v821, %v1123
        %1125 = vmatmul.bf16.gmra.mxu0 %v784
        %v1126 = vpop.f32.mrf.mxu0
        %v1127 = vadd.f32 %v821, %v1126
        %v1128 = vpop.f32.mrf.mxu0
        %v1129 = vadd.f32 %v821, %v1128
        %1130 = vdwg.mxu0
        %1131 = vmatpush.bf16.msra.mxu0 %v951
        %1132 = vmatpush.bf16.msra.mxu0 %v949
        %1133 = vmatpush.bf16.msra.mxu0 %v947
        %1134 = vmatpush.bf16.msra.mxu0 %v945
        %1135 = vmatpush.bf16.msra.mxu0 %v943
        %1136 = vmatpush.bf16.msra.mxu0 %v941
        %1137 = vmatpush.bf16.msra.mxu0 %v939
        %1138 = vmatpush.bf16.msra.mxu0 %v937
        %1139 = vmatmul.bf16.gmra.mxu0 %v771
        %v1140 = vpop.f32.mrf.mxu0
        %v1141 = vadd.f32 %v1092, %v1140
        %v1142 = vpop.f32.mrf.mxu0
        %v1143 = vadd.f32 %v1094, %v1142
        %1144 = vmatmul.bf16.gmra.mxu0 %v773
        %v1145 = vpop.f32.mrf.mxu0
        %v1146 = vadd.f32 %v1097, %v1145
        %v1147 = vpop.f32.mrf.mxu0
        %v1148 = vadd.f32 %v1099, %v1147
        %1149 = vmatmul.bf16.gmra.mxu0 %v775
        %v1150 = vpop.f32.mrf.mxu0
        %v1151 = vadd.f32 %v1102, %v1150
        %v1152 = vpop.f32.mrf.mxu0
        %v1153 = vadd.f32 %v1104, %v1152
        %1154 = vmatmul.bf16.gmra.mxu0 %v777
        %v1155 = vpop.f32.mrf.mxu0
        %v1156 = vadd.f32 %v1107, %v1155
        %v1157 = vpop.f32.mrf.mxu0
        %v1158 = vadd.f32 %v1109, %v1157
        %1159 = vmatmul.bf16.gmra.mxu0 %v779
        %v1160 = vpop.f32.mrf.mxu0
        %v1161 = vadd.f32 %v1112, %v1160
        %v1162 = vpop.f32.mrf.mxu0
        %v1163 = vadd.f32 %v1114, %v1162
        %1164 = vmatmul.bf16.gmra.mxu0 %v781
        %v1165 = vpop.f32.mrf.mxu0
        %v1166 = vadd.f32 %v1117, %v1165
        %v1167 = vpop.f32.mrf.mxu0
        %v1168 = vadd.f32 %v1119, %v1167
        %1169 = vmatmul.bf16.gmra.mxu0 %v783
        %v1170 = vpop.f32.mrf.mxu0
        %v1171 = vadd.f32 %v1122, %v1170
        %v1172 = vpop.f32.mrf.mxu0
        %v1173 = vadd.f32 %v1124, %v1172
        %1174 = vmatmul.bf16.gmra.mxu0 %v785
        %v1175 = vpop.f32.mrf.mxu0
        %v1176 = vadd.f32 %v1127, %v1175
        %v1177 = vpop.f32.mrf.mxu0
        %v1178 = vadd.f32 %v1129, %v1177
        %1179 = vdwg.mxu0
        %v1180 = vmax.f32 %v1043, 0.0
        %v1181 = vmax.f32 %v1141, 0.0
        %v1182 = vmax.f32 %v1045, 0.0
        %v1183 = vmax.f32 %v1143, 0.0
        %v1184 = vmax.f32 %v1048, 0.0
        %v1185 = vmax.f32 %v1146, 0.0
        %v1186 = vmax.f32 %v1050, 0.0
        %v1187 = vmax.f32 %v1148, 0.0
        %v1188 = vmax.f32 %v1053, 0.0
        %v1189 = vmax.f32 %v1151, 0.0
        %v1190 = vmax.f32 %v1055, 0.0
        %v1191 = vmax.f32 %v1153, 0.0
        %v1192 = vmax.f32 %v1058, 0.0
        %v1193 = vmax.f32 %v1156, 0.0
        %v1194 = vmax.f32 %v1060, 0.0
        %v1195 = vmax.f32 %v1158, 0.0
        %v1196 = vmax.f32 %v1063, 0.0
        %v1197 = vmax.f32 %v1161, 0.0
        %v1198 = vmax.f32 %v1065, 0.0
        %v1199 = vmax.f32 %v1163, 0.0
        %v1200 = vmax.f32 %v1068, 0.0
        %v1201 = vmax.f32 %v1166, 0.0
        %v1202 = vmax.f32 %v1070, 0.0
        %v1203 = vmax.f32 %v1168, 0.0
        %v1204 = vmax.f32 %v1073, 0.0
        %v1205 = vmax.f32 %v1171, 0.0
        %v1206 = vmax.f32 %v1075, 0.0
        %v1207 = vmax.f32 %v1173, 0.0
        %v1208 = vmax.f32 %v1078, 0.0
        %v1209 = vmax.f32 %v1176, 0.0
        %v1210 = vmax.f32 %v1080, 0.0
        %v1211 = vmax.f32 %v1178, 0.0
        %v1212 = vadd.f32 %v1180, %v296
        %v1213 = vadd.f32 %v1181, %v297
        %v1214 = vadd.f32 %v1182, %v298
        %v1215 = vadd.f32 %v1183, %v299
        %v1216 = vadd.f32 %v1184, %v300
        %v1217 = vadd.f32 %v1185, %v301
        %v1218 = vadd.f32 %v1186, %v302
        %v1219 = vadd.f32 %v1187, %v303
        %v1220 = vadd.f32 %v1188, %v304
        %v1221 = vadd.f32 %v1189, %v305
        %v1222 = vadd.f32 %v1190, %v306
        %v1223 = vadd.f32 %v1191, %v307
        %v1224 = vadd.f32 %v1192, %v308
        %v1225 = vadd.f32 %v1193, %v309
        %v1226 = vadd.f32 %v1194, %v310
        %v1227 = vadd.f32 %v1195, %v311
        %v1228 = vadd.f32 %v1196, %v312
        %v1229 = vadd.f32 %v1197, %v313
        %v1230 = vadd.f32 %v1198, %v314
        %v1231 = vadd.f32 %v1199, %v315
        %v1232 = vadd.f32 %v1200, %v316
        %v1233 = vadd.f32 %v1201, %v317
        %v1234 = vadd.f32 %v1202, %v318
        %v1235 = vadd.f32 %v1203, %v319
        %v1236 = vadd.f32 %v1204, %v320
        %v1237 = vadd.f32 %v1205, %v321
        %v1238 = vadd.f32 %v1206, %v322
        %v1239 = vadd.f32 %v1207, %v323
        %v1240 = vadd.f32 %v1208, %v324
        %v1241 = vadd.f32 %v1209, %v325
        %v1242 = vadd.f32 %v1210, %v326
        %v1243 = vadd.f32 %v1211, %v327
        %1244 = vst [vmem:[%s293] sm:$0xff] %v1212
        %1245 = vst [vmem:[%s293 + $0x8] sm:$0xff] %v1213
        %1246 = vst [vmem:[%s293 + $0x10] sm:$0xff] %v1214
        %1247 = vst [vmem:[%s293 + $0x18] sm:$0xff] %v1215
        %1248 = vst [vmem:[%s293 + $0x20] sm:$0xff] %v1216
        %1249 = vst [vmem:[%s293 + $0x28] sm:$0xff] %v1217
        %1250 = vst [vmem:[%s293 + $0x30] sm:$0xff] %v1218
        %1251 = vst [vmem:[%s293 + $0x38] sm:$0xff] %v1219
        %1252 = vst [vmem:[%s293 + $0x40] sm:$0xff] %v1220
        %1253 = vst [vmem:[%s293 + $0x48] sm:$0xff] %v1221
        %1254 = vst [vmem:[%s293 + $0x50] sm:$0xff] %v1222
        %1255 = vst [vmem:[%s293 + $0x58] sm:$0xff] %v1223
        %1256 = vst [vmem:[%s293 + $0x60] sm:$0xff] %v1224
        %1257 = vst [vmem:[%s293 + $0x68] sm:$0xff] %v1225
        %1258 = vst [vmem:[%s293 + $0x70] sm:$0xff] %v1226
        %1259 = vst [vmem:[%s293 + $0x78] sm:$0xff] %v1227
        %1260 = vst [vmem:[%s293 + $0x80] sm:$0xff] %v1228
        %1261 = vst [vmem:[%s293 + $0x88] sm:$0xff] %v1229
        %1262 = vst [vmem:[%s293 + $0x90] sm:$0xff] %v1230
        %1263 = vst [vmem:[%s293 + $0x98] sm:$0xff] %v1231
        %1264 = vst [vmem:[%s293 + $0xa0] sm:$0xff] %v1232
        %1265 = vst [vmem:[%s293 + $0xa8] sm:$0xff] %v1233
        %1266 = vst [vmem:[%s293 + $0xb0] sm:$0xff] %v1234
        %1267 = vst [vmem:[%s293 + $0xb8] sm:$0xff] %v1235
        %1268 = vst [vmem:[%s293 + $0xc0] sm:$0xff] %v1236
        %1269 = vst [vmem:[%s293 + $0xc8] sm:$0xff] %v1237
        %1270 = vst [vmem:[%s293 + $0xd0] sm:$0xff] %v1238
        %1271 = vst [vmem:[%s293 + $0xd8] sm:$0xff] %v1239
        %1272 = vst [vmem:[%s293 + $0xe0] sm:$0xff] %v1240
        %1273 = vst [vmem:[%s293 + $0xe8] sm:$0xff] %v1241
        %1274 = vst [vmem:[%s293 + $0xf0] sm:$0xff] %v1242
        %1275 = vst [vmem:[%s293 + $0xf8] sm:$0xff] %v1243
        %s1276 = sand.u32 %s142, 1
        %s1277 = scalar_lea.sflag [#allocation4], %s1276
        %s1278 = sand.u32 %s142, 1
        %s1279 = smul.addr %s1278, 256
        %s1280 = scalar_lea.vmem [#allocation10], %s1279
        // Predicated region
        $region57: #{tpu_custom_call.1} parent=39 // pred_check
          %p1281 = pneg %p152
        $region58: #{tpu_custom_call.1} parent=39 // pred_check_branch
          %1283 = sbr.rel (%p1281) target = $region60
        $region59: #{tpu_custom_call.1} parent=39 // pred_region
          %s1284 = smul.u32 16, %s24
          %1286 = vsyncadd %s1277, 0
          %s1287 = smul.addr %s1284, 2
          %s1288 = smul.addr %s1287, 8
          %s1289 = scalar_lea.hbm %s5, %s1288
          %s1290 = sshll.u32 %s1280, 4
          %s1291 = int_to_ptr.vmem [resolvable:$true] %s1290
          %s1292 = sshll.u32 %s1289, 4
          %s1293 = int_to_ptr.hbm [resolvable:$true] %s1292
          %1298 = dma.vmem_to_hbm [thread:$0]  %s1291, 4096, %s1293, %s1277, 256, 256, 16
        $region60: #{tpu_custom_call.1} parent=39 // pred_fallthru
          _
      $region40: #{tpu_custom_call.1} parent=5 // pred_fallthru
        _
      %p1299 = scmp.le.s32.totalorder 2, %s19
      // Predicated region
      $region61: #{tpu_custom_call.1} parent=5 // pred_check
        %p1300 = pneg %p1299
      $region62: #{tpu_custom_call.1} parent=5 // pred_check_branch
        %1302 = sbr.rel (%p1300) target = $region64
      $region63: #{tpu_custom_call.1} parent=5 // pred_region
        %s1303 = ssub.s32 %s19, 2
        // Predicated region
        $region65: #{tpu_custom_call.1} parent=63 // pred_check
          %p1304 = pneg %p158
        $region66: #{tpu_custom_call.1} parent=63 // pred_check_branch
          %1306 = sbr.rel (%p1304) target = $region68
        $region67: #{tpu_custom_call.1} parent=63 // pred_region
          %s1307 = sand.u32 %s143, 1
          %s1308 = scalar_lea.sflag [#allocation4], %s1307
          %s1309 = sand.u32 %s143, 1
          %s1310 = smul.addr %s1309, 256
          %s1311 = scalar_lea.vmem [#allocation10], %s1310
          %1313 = dma.done %s1308, 4096
        $region68: #{tpu_custom_call.1} parent=63 // pred_fallthru
          _
      $region64: #{tpu_custom_call.1} parent=5 // pred_fallthru
        _
    $region6: #{tpu_custom_call.1} parent=1 // loop_footer
      %s23 = sadd.s32 1, %s19
    $region7: #{tpu_custom_call.1} parent=1 // loop_footer_branch
      %18 = sbr.rel target = $region3
    $region8: #{tpu_custom_call.1} parent=1 // loop_exit
      _
    %1314 = vsyncpa [#allocation3], 1
    %s1315 = scalar_lea.sflag [#allocation3], 1
    %1316 = vsyncpa %s1315, 1
    %1317 = vsyncpa [#allocation6], 1
    %1318 = vsyncpa [#allocation9], 1
    %1319 = vsyncpa [#allocation4], 1
    %s1320 = scalar_lea.sflag [#allocation4], 1
    %1321 = vsyncpa %s1320, 1

// kernel: tpu_custom_call.1
$region0: #{tpu_custom_call.1}
  #allocation0 [shape = 'u32[]', space=smem, size = 0x4, offset = 0x4, fixed_abs, tag = 'smem constant byte address 0x4 - core index']
  #allocation1 [shape = 'u32[72,128]{1,0:T(1,128)}', space=vmem, size = 0x9000, scoped, tag = 'internal scratch']
  %s0 = inlined_call_operand.hbm [shape: f32[512,256], index: 0, kind: input, shape index: {}]
  %s1 = inlined_call_operand.hbm [shape: bf16[256,256], index: 1, kind: input, shape index: {}]
  %s2 = inlined_call_operand.hbm [shape: f32[1,256], index: 2, kind: input, shape index: {}]
  %s3 = inlined_call_operand.hbm [shape: bf16[256,256], index: 3, kind: input, shape index: {}]
  %s4 = inlined_call_operand.vmem [shape: f32[1,256], index: 4, kind: input, shape index: {}]
  %s5 = inlined_call_operand.hbm [shape: f32[512,256], index: 5, kind: output, shape index: {}]
  %s6 = sld [smem:[#allocation0]]
  $region69: #{tpu_custom_call.1} parent=0
    _
  %s8 = ssub.s32 1, %s6
  %s9 = scalar_select 0, %s8, %s6
  $region1: #{tpu_custom_call.1} parent=0
    #allocation2 [shape = 'u8[262144]{0}', space=vmem, size = 0x40000, scoped, tag = 'input window, operand 0']
    #allocation3 [shape = 's32[2]{0}', space=sflag, size = 0x8, scoped, tag = 'scoped memory for tpu_custom_call.1']
    #allocation4 [shape = 's32[2]{0}', space=sflag, size = 0x8, scoped, tag = 'scoped memory for tpu_custom_call.1']
    #allocation5 [shape = 'u8[131072]{0}', space=vmem, size = 0x20000, scoped, tag = 'input window, operand 1, single buffered']
    #allocation6 [shape = 's32[1]{0}', space=sflag, size = 0x4, scoped, tag = 'scoped memory for tpu_custom_call.1']
    #allocation7 [shape = 'u8[1024]{0}', space=vmem, size = 0x400, scoped, tag = 'input window, operand 2, single buffered']
    #allocation8 [shape = 'u8[131072]{0}', space=vmem, size = 0x20000, scoped, tag = 'input window, operand 3, single buffered']
    #allocation9 [shape = 's32[1]{0}', space=sflag, size = 0x4, scoped, tag = 'scoped memory for tpu_custom_call.1']
    #allocation10 [shape = 'u8[262144]{0}', space=vmem, size = 0x40000, scoped, tag = 'output window, operand 0']
    %10 = vsyncpa [#allocation3], 0
    %s11 = scalar_lea.sflag [#allocation3], 1
    %12 = vsyncpa %s11, 0
    %13 = vsyncpa [#allocation6], 0
    %14 = vsyncpa [#allocation9], 0
    %15 = vsyncpa [#allocation4], 0
    %s16 = scalar_lea.sflag [#allocation4], 1
    %17 = vsyncpa %s16, 0
    loop: start=0, step=1, limit=6
    $region2: #{tpu_custom_call.1} parent=1 // loop_pre_header
      _
    $region3: #{tpu_custom_call.1} parent=1 // loop_header
      %s19 = sphi 0, %s23
      %p20 = scmp.ge.s32.totalorder %s19, 6
      %s29 = sphi 0, %s31
      %s32 = sphi 0, %s29
      %s33 = sphi 0, %s32
      %s49 = sphi 0, %s33
      %s53 = sphi 0, %s53
      %s55 = sphi 0, %s53
      %s56 = sphi 0, %s55
      %s70 = sphi 0, %s56
      %s74 = sphi 0, %s74
      %s76 = sphi 0, %s74
      %s77 = sphi 0, %s76
      %s91 = sphi 0, %s77
      %s95 = sphi 0, %s95
      %s97 = sphi 0, %s95
      %s98 = sphi 0, %s97
      %s112 = sphi 0, %s98
      %s116 = sphi 0, %s116
      %s118 = sphi 0, %s116
      %s119 = sphi 0, %s118
      %s133 = sphi 0, %s119
      %s139 = sphi 0, %s141
      %s142 = sphi 0, %s139
      %s143 = sphi 0, %s142
      %s159 = sphi 0, %s143
    $region4: #{tpu_custom_call.1} parent=1 // loop_header_branch
      %22 = sbr.rel (%p20) target = $region8
    $region5: #{tpu_custom_call.1} parent=1 // loop_body
      %s24 = ssub.s32 %s19, 1
      %s25 = ssub.s32 %s19, 2
      %s26 = sadd.s32 %s19, 1
      %s27 = ssub.s32 %s19, %s26
      %p28 = scmp.eq.s32.totalorder %s27, 0
      %s30 = sadd.s32 %s29, 1
      %s31 = scalar_select %p28, %s29, %s30
      %p34 = pneg %p28
      %p35 = scmp.eq.s32.totalorder %s19, 3
      %p36 = por %p34, %p35
      %p37 = scmp.ne.s32.totalorder %s29, %s32
      %p38 = scmp.eq.s32.totalorder %s19, 0
      %p39 = por %p37, %p38
      %p40 = scmp.ne.s32.totalorder %s29, %s32
      %p41 = scmp.eq.s32.totalorder %s24, 3
      %p42 = por %p40, %p41
      %p43 = scmp.ne.s32.totalorder %s32, %s33
      %p44 = scmp.eq.s32.totalorder %s24, 0
      %p45 = por %p43, %p44
      %p46 = scmp.ne.s32.totalorder %s32, %s33
      %p47 = scmp.eq.s32.totalorder %s25, 3
      %p48 = por %p46, %p47
      %p50 = scmp.ne.s32.totalorder %s33, %s49
      %p51 = scmp.eq.s32.totalorder %s25, 0
      %p52 = por %p50, %p51
      %s54 = sadd.s32 %s53, 1
      %p57 = scmp.eq.s32.totalorder %s19, 3
      %p58 = scmp.ne.s32.totalorder %s53, %s55
      %p59 = scmp.eq.s32.totalorder %s19, 0
      %p60 = por %p58, %p59
      %p61 = scmp.ne.s32.totalorder %s53, %s55
      %p62 = scmp.eq.s32.totalorder %s24, 3
      %p63 = por %p61, %p62
      %p64 = scmp.ne.s32.totalorder %s55, %s56
      %p65 = scmp.eq.s32.totalorder %s24, 0
      %p66 = por %p64, %p65
      %p67 = scmp.ne.s32.totalorder %s55, %s56
      %p68 = scmp.eq.s32.totalorder %s25, 3
      %p69 = por %p67, %p68
      %p71 = scmp.ne.s32.totalorder %s56, %s70
      %p72 = scmp.eq.s32.totalorder %s25, 0
      %p73 = por %p71, %p72
      %s75 = sadd.s32 %s74, 1
      %p78 = scmp.eq.s32.totalorder %s19, 3
      %p79 = scmp.ne.s32.totalorder %s74, %s76
      %p80 = scmp.eq.s32.totalorder %s19, 0
      %p81 = por %p79, %p80
      %p82 = scmp.ne.s32.totalorder %s74, %s76
      %p83 = scmp.eq.s32.totalorder %s24, 3
      %p84 = por %p82, %p83
      %p85 = scmp.ne.s32.totalorder %s76, %s77
      %p86 = scmp.eq.s32.totalorder %s24, 0
      %p87 = por %p85, %p86
      %p88 = scmp.ne.s32.totalorder %s76, %s77
      %p89 = scmp.eq.s32.totalorder %s25, 3
      %p90 = por %p88, %p89
      %p92 = scmp.ne.s32.totalorder %s77, %s91
      %p93 = scmp.eq.s32.totalorder %s25, 0
      %p94 = por %p92, %p93
      %s96 = sadd.s32 %s95, 1
      %p99 = scmp.eq.s32.totalorder %s19, 3
      %p100 = scmp.ne.s32.totalorder %s95, %s97
      %p101 = scmp.eq.s32.totalorder %s19, 0
      %p102 = por %p100, %p101
      %p103 = scmp.ne.s32.totalorder %s95, %s97
      %p104 = scmp.eq.s32.totalorder %s24, 3
      %p105 = por %p103, %p104
      %p106 = scmp.ne.s32.totalorder %s97, %s98
      %p107 = scmp.eq.s32.totalorder %s24, 0
      %p108 = por %p106, %p107
      %p109 = scmp.ne.s32.totalorder %s97, %s98
      %p110 = scmp.eq.s32.totalorder %s25, 3
      %p111 = por %p109, %p110
      %p113 = scmp.ne.s32.totalorder %s98, %s112
      %p114 = scmp.eq.s32.totalorder %s25, 0
      %p115 = por %p113, %p114
      %s117 = sadd.s32 %s116, 1
      %p120 = scmp.eq.s32.totalorder %s19, 3
      %p121 = scmp.ne.s32.totalorder %s116, %s118
      %p122 = scmp.eq.s32.totalorder %s19, 0
      %p123 = por %p121, %p122
      %p124 = scmp.ne.s32.totalorder %s116, %s118
      %p125 = scmp.eq.s32.totalorder %s24, 3
      %p126 = por %p124, %p125
      %p127 = scmp.ne.s32.totalorder %s118, %s119
      %p128 = scmp.eq.s32.totalorder %s24, 0
      %p129 = por %p127, %p128
      %p130 = scmp.ne.s32.totalorder %s118, %s119
      %p131 = scmp.eq.s32.totalorder %s25, 3
      %p132 = por %p130, %p131
      %p134 = scmp.ne.s32.totalorder %s119, %s133
      %p135 = scmp.eq.s32.totalorder %s25, 0
      %p136 = por %p134, %p135
      %s137 = ssub.s32 %s19, %s26
      %p138 = scmp.eq.s32.totalorder %s137, 0
      %s140 = sadd.s32 %s139, 1
      %s141 = scalar_select %p138, %s139, %s140
      %p144 = pneg %p138
      %p145 = scmp.eq.s32.totalorder %s19, 3
      %p146 = por %p144, %p145
      %p147 = scmp.ne.s32.totalorder %s139, %s142
      %p148 = scmp.eq.s32.totalorder %s19, 0
      %p149 = por %p147, %p148
      %p150 = scmp.ne.s32.totalorder %s139, %s142
      %p151 = scmp.eq.s32.totalorder %s24, 3
      %p152 = por %p150, %p151
      %p153 = scmp.ne.s32.totalorder %s142, %s143
      %p154 = scmp.eq.s32.totalorder %s24, 0
      %p155 = por %p153, %p154
      %p156 = scmp.ne.s32.totalorder %s142, %s143
      %p157 = scmp.eq.s32.totalorder %s25, 3
      %p158 = por %p156, %p157
      %p160 = scmp.ne.s32.totalorder %s143, %s159
      %p161 = scmp.eq.s32.totalorder %s25, 0
      %p162 = por %p160, %p161
      %p163 = scmp.le.s32.totalorder 1, %s19
      %p164 = scmp.lt.s32.totalorder %s19, 5
      %p165 = pnand %p163, %p164
      %p166 = pneg %p165
      // Predicated region
      $region9: #{tpu_custom_call.1} parent=5 // pred_check
        _
      $region10: #{tpu_custom_call.1} parent=5 // pred_check_branch
        %168 = sbr.rel (%p165) target = $region12
      $region11: #{tpu_custom_call.1} parent=5 // pred_region
        %s169 = ssub.s32 %s19, 1
        // Predicated region
        $region13: #{tpu_custom_call.1} parent=11 // pred_check
          %p170 = pneg %p66
        $region14: #{tpu_custom_call.1} parent=11 // pred_check_branch
          %172 = sbr.rel (%p170) target = $region16
        $region15: #{tpu_custom_call.1} parent=11 // pred_region
          %174 = vsyncadd [#allocation6], 0
          %s175 = sshll.u32 %s1, 4
          %s176 = int_to_ptr.hbm [resolvable:$true] %s175
          %s177 = sshll.u32 [#allocation5], 4
          %s178 = int_to_ptr.vmem [resolvable:$true] %s177
          %183 = dma.hbm_to_vmem [thread:$0]  %s176, 4096, %s178, [#allocation6], 128, 128, 8
        $region16: #{tpu_custom_call.1} parent=11 // pred_fallthru
          _
        // Predicated region
        $region17: #{tpu_custom_call.1} parent=11 // pred_check
          %p184 = pneg %p87
        $region18: #{tpu_custom_call.1} parent=11 // pred_check_branch
          %186 = sbr.rel (%p184) target = $region20
        $region19: #{tpu_custom_call.1} parent=11 // pred_region
          %188 = vsyncadd [#allocation6], 0
          %s190 = sshll.u32 %s2, 4
          %s191 = int_to_ptr.hbm [resolvable:$true] %s190
          %s192 = sshll.u32 [#allocation7], 4
          %s193 = int_to_ptr.vmem [resolvable:$true] %s192
          %195 = dma.hbm_to_vmem [thread:$0]  %s191, 32, %s193, [#allocation6]
        $region20: #{tpu_custom_call.1} parent=11 // pred_fallthru
          _
        // Predicated region
        $region21: #{tpu_custom_call.1} parent=11 // pred_check
          %p196 = pneg %p108
        $region22: #{tpu_custom_call.1} parent=11 // pred_check_branch
          %198 = sbr.rel (%p196) target = $region24
        $region23: #{tpu_custom_call.1} parent=11 // pred_region
          %200 = vsyncadd [#allocation9], 0
          %s201 = sshll.u32 %s3, 4
          %s202 = int_to_ptr.hbm [resolvable:$true] %s201
          %s203 = sshll.u32 [#allocation8], 4
          %s204 = int_to_ptr.vmem [resolvable:$true] %s203
          %209 = dma.hbm_to_vmem [thread:$0]  %s202, 4096, %s204, [#allocation9], 128, 128, 8
        $region24: #{tpu_custom_call.1} parent=11 // pred_fallthru
          _
        // Predicated region
        $region25: #{tpu_custom_call.1} parent=11 // pred_check
          %p210 = pneg %p129
        $region26: #{tpu_custom_call.1} parent=11 // pred_check_branch
          %212 = sbr.rel (%p210) target = $region28
        $region27: #{tpu_custom_call.1} parent=11 // pred_region
          _
        $region28: #{tpu_custom_call.1} parent=11 // pred_fallthru
          _
      $region12: #{tpu_custom_call.1} parent=5 // pred_fallthru
        _
      %p213 = scmp.lt.s32.totalorder %s19, 4
      // Predicated region
      $region29: #{tpu_custom_call.1} parent=5 // pred_check
        %p214 = pneg %p213
      $region30: #{tpu_custom_call.1} parent=5 // pred_check_branch
        %216 = sbr.rel (%p214) target = $region32
      $region31: #{tpu_custom_call.1} parent=5 // pred_region
        // Predicated region
        $region33: #{tpu_custom_call.1} parent=31 // pred_check
          %p217 = pneg %p39
        $region34: #{tpu_custom_call.1} parent=31 // pred_check_branch
          %219 = sbr.rel (%p217) target = $region36
        $region35: #{tpu_custom_call.1} parent=31 // pred_region
          %s220 = sand.u32 %s29, 1
          %s221 = scalar_lea.sflag [#allocation3], %s220
          %s222 = sand.u32 %s29, 1
          %s223 = smul.addr %s222, 256
          %s224 = scalar_lea.vmem [#allocation2], %s223
          %s225 = smul.u32 16, %s19
          %227 = vsyncadd %s221, 0
          %s228 = smul.addr %s225, 2
          %s229 = smul.addr %s228, 8
          %s230 = scalar_lea.hbm %s0, %s229
          %s231 = sshll.u32 %s230, 4
          %s232 = int_to_ptr.hbm [resolvable:$true] %s231
          %s233 = sshll.u32 %s224, 4
          %s234 = int_to_ptr.vmem [resolvable:$true] %s233
          %239 = dma.hbm_to_vmem [thread:$0]  %s232, 4096, %s234, %s221, 256, 256, 16
        $region36: #{tpu_custom_call.1} parent=31 // pred_fallthru
          _
      $region32: #{tpu_custom_call.1} parent=5 // pred_fallthru
        _
      %p240 = scmp.le.s32.totalorder 1, %s19
      %p241 = scmp.lt.s32.totalorder %s19, 5
      %p242 = pnand %p240, %p241
      %p243 = pneg %p242
      // Predicated region
      $region37: #{tpu_custom_call.1} parent=5 // pred_check
        _
      $region38: #{tpu_custom_call.1} parent=5 // pred_check_branch
        %245 = sbr.rel (%p242) target = $region40
      $region39: #{tpu_custom_call.1} parent=5 // pred_region
        %s246 = ssub.s32 %s19, 1
        %s247 = sand.u32 %s32, 1
        %s248 = scalar_lea.sflag [#allocation3], %s247
        %s249 = sand.u32 %s32, 1
        %s250 = smul.addr %s249, 256
        %s251 = scalar_lea.vmem [#allocation2], %s250
        // Predicated region
        $region41: #{tpu_custom_call.1} parent=39 // pred_check
          %p252 = pneg %p45
        $region42: #{tpu_custom_call.1} parent=39 // pred_check_branch
          %254 = sbr.rel (%p252) target = $region44
        $region43: #{tpu_custom_call.1} parent=39 // pred_region
          %256 = dma.done %s248, 4096
        $region44: #{tpu_custom_call.1} parent=39 // pred_fallthru
          _
        // Predicated region
        $region45: #{tpu_custom_call.1} parent=39 // pred_check
          %p257 = pneg %p66
        $region46: #{tpu_custom_call.1} parent=39 // pred_check_branch
          %259 = sbr.rel (%p257) target = $region48
        $region47: #{tpu_custom_call.1} parent=39 // pred_region
          %261 = dma.done [#allocation6], 4096
        $region48: #{tpu_custom_call.1} parent=39 // pred_fallthru
          _
        // Predicated region
        $region49: #{tpu_custom_call.1} parent=39 // pred_check
          %p262 = pneg %p87
        $region50: #{tpu_custom_call.1} parent=39 // pred_check_branch
          %264 = sbr.rel (%p262) target = $region52
        $region51: #{tpu_custom_call.1} parent=39 // pred_region
          %266 = dma.done [#allocation6], 32
        $region52: #{tpu_custom_call.1} parent=39 // pred_fallthru
          _
        // Predicated region
        $region53: #{tpu_custom_call.1} parent=39 // pred_check
          %p267 = pneg %p108
        $region54: #{tpu_custom_call.1} parent=39 // pred_check_branch
          %269 = sbr.rel (%p267) target = $region56
        $region55: #{tpu_custom_call.1} parent=39 // pred_region
          %271 = dma.done [#allocation9], 4096
        $region56: #{tpu_custom_call.1} parent=39 // pred_fallthru
          _
        %s272 = sand.u32 %s32, 1
        %s273 = scalar_lea.sflag [#allocation3], %s272
        %s274 = sand.u32 %s32, 1
        %s275 = smul.addr %s274, 256
        %s276 = scalar_lea.vmem [#allocation2], %s275
        %p277 = pneg %p45
        %p278 = pneg %p42
        %p279 = pneg %p66
        %p280 = pneg %p63
        %p281 = pneg %p87
        %p282 = pneg %p84
        %p283 = pneg %p108
        %p284 = pneg %p105
        %p285 = pneg %p129
        %p286 = pneg %p126
        %p287 = pneg %p155
        %p288 = pneg %p152
        %s289 = sand.u32 %s142, 1
        %s290 = scalar_lea.sflag [#allocation4], %s289
        %s291 = sand.u32 %s142, 1
        %s292 = smul.addr %s291, 256
        %s293 = scalar_lea.vmem [#allocation10], %s292
        %s294 = smul.u32 16, %s24
        %s295 = smul.u32 16, %s24
        %v296 = vld [vmem:[%s251] sm:$0xff]
        %v297 = vld [vmem:[%s251 + $0x8] sm:$0xff]
        %v298 = vld [vmem:[%s251 + $0x10] sm:$0xff]
        %v299 = vld [vmem:[%s251 + $0x18] sm:$0xff]
        %v300 = vld [vmem:[%s251 + $0x20] sm:$0xff]
        %v301 = vld [vmem:[%s251 + $0x28] sm:$0xff]
        %v302 = vld [vmem:[%s251 + $0x30] sm:$0xff]
        %v303 = vld [vmem:[%s251 + $0x38] sm:$0xff]
        %v304 = vld [vmem:[%s251 + $0x40] sm:$0xff]
        %v305 = vld [vmem:[%s251 + $0x48] sm:$0xff]
        %v306 = vld [vmem:[%s251 + $0x50] sm:$0xff]
        %v307 = vld [vmem:[%s251 + $0x58] sm:$0xff]
        %v308 = vld [vmem:[%s251 + $0x60] sm:$0xff]
        %v309 = vld [vmem:[%s251 + $0x68] sm:$0xff]
        %v310 = vld [vmem:[%s251 + $0x70] sm:$0xff]
        %v311 = vld [vmem:[%s251 + $0x78] sm:$0xff]
        %v312 = vld [vmem:[%s251 + $0x80] sm:$0xff]
        %v313 = vld [vmem:[%s251 + $0x88] sm:$0xff]
        %v314 = vld [vmem:[%s251 + $0x90] sm:$0xff]
        %v315 = vld [vmem:[%s251 + $0x98] sm:$0xff]
        %v316 = vld [vmem:[%s251 + $0xa0] sm:$0xff]
        %v317 = vld [vmem:[%s251 + $0xa8] sm:$0xff]
        %v318 = vld [vmem:[%s251 + $0xb0] sm:$0xff]
        %v319 = vld [vmem:[%s251 + $0xb8] sm:$0xff]
        %v320 = vld [vmem:[%s251 + $0xc0] sm:$0xff]
        %v321 = vld [vmem:[%s251 + $0xc8] sm:$0xff]
        %v322 = vld [vmem:[%s251 + $0xd0] sm:$0xff]
        %v323 = vld [vmem:[%s251 + $0xd8] sm:$0xff]
        %v324 = vld [vmem:[%s251 + $0xe0] sm:$0xff]
        %v325 = vld [vmem:[%s251 + $0xe8] sm:$0xff]
        %v326 = vld [vmem:[%s251 + $0xf0] sm:$0xff]
        %v327 = vld [vmem:[%s251 + $0xf8] sm:$0xff]
        %v328 = vpack.c.bf16 %v298, %v296
        %v329 = vpack.c.bf16 %v299, %v297
        %v330 = vpack.c.bf16 %v302, %v300
        %v331 = vpack.c.bf16 %v303, %v301
        %v332 = vpack.c.bf16 %v306, %v304
        %v333 = vpack.c.bf16 %v307, %v305
        %v334 = vpack.c.bf16 %v310, %v308
        %v335 = vpack.c.bf16 %v311, %v309
        %v336 = vpack.c.bf16 %v314, %v312
        %v337 = vpack.c.bf16 %v315, %v313
        %v338 = vpack.c.bf16 %v318, %v316
        %v339 = vpack.c.bf16 %v319, %v317
        %v340 = vpack.c.bf16 %v322, %v320
        %v341 = vpack.c.bf16 %v323, %v321
        %v342 = vpack.c.bf16 %v326, %v324
        %v343 = vpack.c.bf16 %v327, %v325
        %v344 = vld [vmem:[#allocation5] sm:$0xff]
        %v345 = vld [vmem:[#allocation5 + $0x8] sm:$0xff]
        %v346 = vld [vmem:[#allocation5 + $0x10] sm:$0xff]
        %v347 = vld [vmem:[#allocation5 + $0x18] sm:$0xff]
        %v348 = vld [vmem:[#allocation5 + $0x20] sm:$0xff]
        %v349 = vld [vmem:[#allocation5 + $0x28] sm:$0xff]
        %v350 = vld [vmem:[#allocation5 + $0x30] sm:$0xff]
        %v351 = vld [vmem:[#allocation5 + $0x38] sm:$0xff]
        %v352 = vld [vmem:[#allocation5 + $0x40] sm:$0xff]
        %v353 = vld [vmem:[#allocation5 + $0x48] sm:$0xff]
        %v354 = vld [vmem:[#allocation5 + $0x50] sm:$0xff]
        %v355 = vld [vmem:[#allocation5 + $0x58] sm:$0xff]
        %v356 = vld [vmem:[#allocation5 + $0x60] sm:$0xff]
        %v357 = vld [vmem:[#allocation5 + $0x68] sm:$0xff]
        %v358 = vld [vmem:[#allocation5 + $0x70] sm:$0xff]
        %v359 = vld [vmem:[#allocation5 + $0x78] sm:$0xff]
        %v360 = vld [vmem:[#allocation5 + $0x80] sm:$0xff]
        %v361 = vld [vmem:[#allocation5 + $0x88] sm:$0xff]
        %v362 = vld [vmem:[#allocation5 + $0x90] sm:$0xff]
        %v363 = vld [vmem:[#allocation5 + $0x98] sm:$0xff]
        %v364 = vld [vmem:[#allocation5 + $0xa0] sm:$0xff]
        %v365 = vld [vmem:[#allocation5 + $0xa8] sm:$0xff]
        %v366 = vld [vmem:[#allocation5 + $0xb0] sm:$0xff]
        %v367 = vld [vmem:[#allocation5 + $0xb8] sm:$0xff]
        %v368 = vld [vmem:[#allocation5 + $0xc0] sm:$0xff]
        %v369 = vld [vmem:[#allocation5 + $0xc8] sm:$0xff]
        %v370 = vld [vmem:[#allocation5 + $0xd0] sm:$0xff]
        %v371 = vld [vmem:[#allocation5 + $0xd8] sm:$0xff]
        %v372 = vld [vmem:[#allocation5 + $0xe0] sm:$0xff]
        %v373 = vld [vmem:[#allocation5 + $0xe8] sm:$0xff]
        %v374 = vld [vmem:[#allocation5 + $0xf0] sm:$0xff]
        %v375 = vld [vmem:[#allocation5 + $0xf8] sm:$0xff]
        %v376 = vld [vmem:[#allocation7] sm:$0x3]
        %v378 = vperm.slane %v376, 0
        %v379 = vperm.slane %v376, 1
        %v414 = vunpack.c.l.b16 %v344
        %v415 = vunpack.c.h.b16 %v344
        %v416 = vunpack.c.l.b16 %v345
        %v417 = vunpack.c.h.b16 %v345
        %v418 = vunpack.c.l.b16 %v346
        %v419 = vunpack.c.h.b16 %v346
        %v420 = vunpack.c.l.b16 %v347
        %v421 = vunpack.c.h.b16 %v347
        %v422 = vunpack.c.l.b16 %v348
        %v423 = vunpack.c.h.b16 %v348
        %v424 = vunpack.c.l.b16 %v349
        %v425 = vunpack.c.h.b16 %v349
        %v426 = vunpack.c.l.b16 %v350
        %v427 = vunpack.c.h.b16 %v350
        %v428 = vunpack.c.l.b16 %v351
        %v429 = vunpack.c.h.b16 %v351
        %v430 = vunpack.c.l.b16 %v352
        %v431 = vunpack.c.h.b16 %v352
        %v432 = vunpack.c.l.b16 %v353
        %v433 = vunpack.c.h.b16 %v353
        %v434 = vunpack.c.l.b16 %v354
        %v435 = vunpack.c.h.b16 %v354
        %v436 = vunpack.c.l.b16 %v355
        %v437 = vunpack.c.h.b16 %v355
        %v438 = vunpack.c.l.b16 %v356
        %v439 = vunpack.c.h.b16 %v356
        %v440 = vunpack.c.l.b16 %v357
        %v441 = vunpack.c.h.b16 %v357
        %v442 = vunpack.c.l.b16 %v358
        %v443 = vunpack.c.h.b16 %v358
        %v444 = vunpack.c.l.b16 %v359
        %v445 = vunpack.c.h.b16 %v359
        %v446 = vunpack.c.l.b16 %v360
        %v447 = vunpack.c.h.b16 %v360
        %v448 = vunpack.c.l.b16 %v361
        %v449 = vunpack.c.h.b16 %v361
        %v450 = vunpack.c.l.b16 %v362
        %v451 = vunpack.c.h.b16 %v362
        %v452 = vunpack.c.l.b16 %v363
        %v453 = vunpack.c.h.b16 %v363
        %v454 = vunpack.c.l.b16 %v364
        %v455 = vunpack.c.h.b16 %v364
        %v456 = vunpack.c.l.b16 %v365
        %v457 = vunpack.c.h.b16 %v365
        %v458 = vunpack.c.l.b16 %v366
        %v459 = vunpack.c.h.b16 %v366
        %v460 = vunpack.c.l.b16 %v367
        %v461 = vunpack.c.h.b16 %v367
        %v462 = vunpack.c.l.b16 %v368
        %v463 = vunpack.c.h.b16 %v368
        %v464 = vunpack.c.l.b16 %v369
        %v465 = vunpack.c.h.b16 %v369
        %v466 = vunpack.c.l.b16 %v370
        %v467 = vunpack.c.h.b16 %v370
        %v468 = vunpack.c.l.b16 %v371
        %v469 = vunpack.c.h.b16 %v371
        %v470 = vunpack.c.l.b16 %v372
        %v471 = vunpack.c.h.b16 %v372
        %v472 = vunpack.c.l.b16 %v373
        %v473 = vunpack.c.h.b16 %v373
        %v474 = vunpack.c.l.b16 %v374
        %v475 = vunpack.c.h.b16 %v374
        %v476 = vunpack.c.l.b16 %v375
        %v477 = vunpack.c.h.b16 %v375
        %v478 = vpack.c.b16 %v416, %v414
        %v479 = vpack.c.b16 %v417, %v415
        %v480 = vpack.c.b16 %v420, %v418
        %v481 = vpack.c.b16 %v421, %v419
        %v482 = vpack.c.b16 %v424, %v422
        %v483 = vpack.c.b16 %v425, %v423
        %v484 = vpack.c.b16 %v428, %v426
        %v485 = vpack.c.b16 %v429, %v427
        %v486 = vpack.c.b16 %v432, %v430
        %v487 = vpack.c.b16 %v433, %v431
        %v488 = vpack.c.b16 %v436, %v434
        %v489 = vpack.c.b16 %v437, %v435
        %v490 = vpack.c.b16 %v440, %v438
        %v491 = vpack.c.b16 %v441, %v439
        %v492 = vpack.c.b16 %v444, %v442
        %v493 = vpack.c.b16 %v445, %v443
        %v494 = vpack.c.b16 %v448, %v446
        %v495 = vpack.c.b16 %v449, %v447
        %v496 = vpack.c.b16 %v452, %v450
        %v497 = vpack.c.b16 %v453, %v451
        %v498 = vpack.c.b16 %v456, %v454
        %v499 = vpack.c.b16 %v457, %v455
        %v500 = vpack.c.b16 %v460, %v458
        %v501 = vpack.c.b16 %v461, %v459
        %v502 = vpack.c.b16 %v464, %v462
        %v503 = vpack.c.b16 %v465, %v463
        %v504 = vpack.c.b16 %v468, %v466
        %v505 = vpack.c.b16 %v469, %v467
        %v506 = vpack.c.b16 %v472, %v470
        %v507 = vpack.c.b16 %v473, %v471
        %v508 = vpack.c.b16 %v476, %v474
        %v509 = vpack.c.b16 %v477, %v475
        %542 = vmatpush.bf16.msra.mxu0 %v492
        %543 = vmatpush.bf16.msra.mxu0 %v490
        %544 = vmatpush.bf16.msra.mxu0 %v488
        %545 = vmatpush.bf16.msra.mxu0 %v486
        %546 = vmatpush.bf16.msra.mxu0 %v484
        %547 = vmatpush.bf16.msra.mxu0 %v482
        %548 = vmatpush.bf16.msra.mxu0 %v480
        %549 = vmatpush.bf16.msra.mxu0 %v478
        %550 = vmatmul.bf16.gmra.mxu0 %v328
        %v551 = vpop.f32.mrf.mxu0
        %v552 = vadd.f32 %v378, %v551
        %v553 = vpop.f32.mrf.mxu0
        %v554 = vadd.f32 %v378, %v553
        %555 = vmatmul.bf16.gmra.mxu0 %v330
        %v556 = vpop.f32.mrf.mxu0
        %v557 = vadd.f32 %v378, %v556
        %v558 = vpop.f32.mrf.mxu0
        %v559 = vadd.f32 %v378, %v558
        %560 = vmatmul.bf16.gmra.mxu0 %v332
        %v561 = vpop.f32.mrf.mxu0
        %v562 = vadd.f32 %v378, %v561
        %v563 = vpop.f32.mrf.mxu0
        %v564 = vadd.f32 %v378, %v563
        %565 = vmatmul.bf16.gmra.mxu0 %v334
        %v566 = vpop.f32.mrf.mxu0
        %v567 = vadd.f32 %v378, %v566
        %v568 = vpop.f32.mrf.mxu0
        %v569 = vadd.f32 %v378, %v568
        %570 = vmatmul.bf16.gmra.mxu0 %v336
        %v571 = vpop.f32.mrf.mxu0
        %v572 = vadd.f32 %v378, %v571
        %v573 = vpop.f32.mrf.mxu0
        %v574 = vadd.f32 %v378, %v573
        %575 = vmatmul.bf16.gmra.mxu0 %v338
        %v576 = vpop.f32.mrf.mxu0
        %v577 = vadd.f32 %v378, %v576
        %v578 = vpop.f32.mrf.mxu0
        %v579 = vadd.f32 %v378, %v578
        %580 = vmatmul.bf16.gmra.mxu0 %v340
        %v581 = vpop.f32.mrf.mxu0
        %v582 = vadd.f32 %v378, %v581
        %v583 = vpop.f32.mrf.mxu0
        %v584 = vadd.f32 %v378, %v583
        %585 = vmatmul.bf16.gmra.mxu0 %v342
        %v586 = vpop.f32.mrf.mxu0
        %v587 = vadd.f32 %v378, %v586
        %v588 = vpop.f32.mrf.mxu0
        %v589 = vadd.f32 %v378, %v588
        %590 = vdwg.mxu0
        %591 = vmatpush.bf16.msra.mxu0 %v508
        %592 = vmatpush.bf16.msra.mxu0 %v506
        %593 = vmatpush.bf16.msra.mxu0 %v504
        %594 = vmatpush.bf16.msra.mxu0 %v502
        %595 = vmatpush.bf16.msra.mxu0 %v500
        %596 = vmatpush.bf16.msra.mxu0 %v498
        %597 = vmatpush.bf16.msra.mxu0 %v496
        %598 = vmatpush.bf16.msra.mxu0 %v494
        %599 = vmatmul.bf16.gmra.mxu0 %v329
        %v600 = vpop.f32.mrf.mxu0
        %v601 = vadd.f32 %v552, %v600
        %v602 = vpop.f32.mrf.mxu0
        %v603 = vadd.f32 %v554, %v602
        %604 = vmatmul.bf16.gmra.mxu0 %v331
        %v605 = vpop.f32.mrf.mxu0
        %v606 = vadd.f32 %v557, %v605
        %v607 = vpop.f32.mrf.mxu0
        %v608 = vadd.f32 %v559, %v607
        %609 = vmatmul.bf16.gmra.mxu0 %v333
        %v610 = vpop.f32.mrf.mxu0
        %v611 = vadd.f32 %v562, %v610
        %v612 = vpop.f32.mrf.mxu0
        %v613 = vadd.f32 %v564, %v612
        %614 = vmatmul.bf16.gmra.mxu0 %v335
        %v615 = vpop.f32.mrf.mxu0
        %v616 = vadd.f32 %v567, %v615
        %v617 = vpop.f32.mrf.mxu0
        %v618 = vadd.f32 %v569, %v617
        %619 = vmatmul.bf16.gmra.mxu0 %v337
        %v620 = vpop.f32.mrf.mxu0
        %v621 = vadd.f32 %v572, %v620
        %v622 = vpop.f32.mrf.mxu0
        %v623 = vadd.f32 %v574, %v622
        %624 = vmatmul.bf16.gmra.mxu0 %v339
        %v625 = vpop.f32.mrf.mxu0
        %v626 = vadd.f32 %v577, %v625
        %v627 = vpop.f32.mrf.mxu0
        %v628 = vadd.f32 %v579, %v627
        %629 = vmatmul.bf16.gmra.mxu0 %v341
        %v630 = vpop.f32.mrf.mxu0
        %v631 = vadd.f32 %v582, %v630
        %v632 = vpop.f32.mrf.mxu0
        %v633 = vadd.f32 %v584, %v632
        %634 = vmatmul.bf16.gmra.mxu0 %v343
        %v635 = vpop.f32.mrf.mxu0
        %v636 = vadd.f32 %v587, %v635
        %v637 = vpop.f32.mrf.mxu0
        %v638 = vadd.f32 %v589, %v637
        %639 = vdwg.mxu0
        %640 = vmatpush.bf16.msra.mxu0 %v493
        %641 = vmatpush.bf16.msra.mxu0 %v491
        %642 = vmatpush.bf16.msra.mxu0 %v489
        %643 = vmatpush.bf16.msra.mxu0 %v487
        %644 = vmatpush.bf16.msra.mxu0 %v485
        %645 = vmatpush.bf16.msra.mxu0 %v483
        %646 = vmatpush.bf16.msra.mxu0 %v481
        %647 = vmatpush.bf16.msra.mxu0 %v479
        %648 = vmatmul.bf16.gmra.mxu0 %v328
        %v649 = vpop.f32.mrf.mxu0
        %v650 = vadd.f32 %v379, %v649
        %v651 = vpop.f32.mrf.mxu0
        %v652 = vadd.f32 %v379, %v651
        %653 = vmatmul.bf16.gmra.mxu0 %v330
        %v654 = vpop.f32.mrf.mxu0
        %v655 = vadd.f32 %v379, %v654
        %v656 = vpop.f32.mrf.mxu0
        %v657 = vadd.f32 %v379, %v656
        %658 = vmatmul.bf16.gmra.mxu0 %v332
        %v659 = vpop.f32.mrf.mxu0
        %v660 = vadd.f32 %v379, %v659
        %v661 = vpop.f32.mrf.mxu0
        %v662 = vadd.f32 %v379, %v661
        %663 = vmatmul.bf16.gmra.mxu0 %v334
        %v664 = vpop.f32.mrf.mxu0
        %v665 = vadd.f32 %v379, %v664
        %v666 = vpop.f32.mrf.mxu0
        %v667 = vadd.f32 %v379, %v666
        %668 = vmatmul.bf16.gmra.mxu0 %v336
        %v669 = vpop.f32.mrf.mxu0
        %v670 = vadd.f32 %v379, %v669
        %v671 = vpop.f32.mrf.mxu0
        %v672 = vadd.f32 %v379, %v671
        %673 = vmatmul.bf16.gmra.mxu0 %v338
        %v674 = vpop.f32.mrf.mxu0
        %v675 = vadd.f32 %v379, %v674
        %v676 = vpop.f32.mrf.mxu0
        %v677 = vadd.f32 %v379, %v676
        %678 = vmatmul.bf16.gmra.mxu0 %v340
        %v679 = vpop.f32.mrf.mxu0
        %v680 = vadd.f32 %v379, %v679
        %v681 = vpop.f32.mrf.mxu0
        %v682 = vadd.f32 %v379, %v681
        %683 = vmatmul.bf16.gmra.mxu0 %v342
        %v684 = vpop.f32.mrf.mxu0
        %v685 = vadd.f32 %v379, %v684
        %v686 = vpop.f32.mrf.mxu0
        %v687 = vadd.f32 %v379, %v686
        %688 = vdwg.mxu0
        %689 = vmatpush.bf16.msra.mxu0 %v509
        %690 = vmatpush.bf16.msra.mxu0 %v507
        %691 = vmatpush.bf16.msra.mxu0 %v505
        %692 = vmatpush.bf16.msra.mxu0 %v503
        %693 = vmatpush.bf16.msra.mxu0 %v501
        %694 = vmatpush.bf16.msra.mxu0 %v499
        %695 = vmatpush.bf16.msra.mxu0 %v497
        %696 = vmatpush.bf16.msra.mxu0 %v495
        %697 = vmatmul.bf16.gmra.mxu0 %v329
        %v698 = vpop.f32.mrf.mxu0
        %v699 = vadd.f32 %v650, %v698
        %v700 = vpop.f32.mrf.mxu0
        %v701 = vadd.f32 %v652, %v700
        %702 = vmatmul.bf16.gmra.mxu0 %v331
        %v703 = vpop.f32.mrf.mxu0
        %v704 = vadd.f32 %v655, %v703
        %v705 = vpop.f32.mrf.mxu0
        %v706 = vadd.f32 %v657, %v705
        %707 = vmatmul.bf16.gmra.mxu0 %v333
        %v708 = vpop.f32.mrf.mxu0
        %v709 = vadd.f32 %v660, %v708
        %v710 = vpop.f32.mrf.mxu0
        %v711 = vadd.f32 %v662, %v710
        %712 = vmatmul.bf16.gmra.mxu0 %v335
        %v713 = vpop.f32.mrf.mxu0
        %v714 = vadd.f32 %v665, %v713
        %v715 = vpop.f32.mrf.mxu0
        %v716 = vadd.f32 %v667, %v715
        %717 = vmatmul.bf16.gmra.mxu0 %v337
        %v718 = vpop.f32.mrf.mxu0
        %v719 = vadd.f32 %v670, %v718
        %v720 = vpop.f32.mrf.mxu0
        %v721 = vadd.f32 %v672, %v720
        %722 = vmatmul.bf16.gmra.mxu0 %v339
        %v723 = vpop.f32.mrf.mxu0
        %v724 = vadd.f32 %v675, %v723
        %v725 = vpop.f32.mrf.mxu0
        %v726 = vadd.f32 %v677, %v725
        %727 = vmatmul.bf16.gmra.mxu0 %v341
        %v728 = vpop.f32.mrf.mxu0
        %v729 = vadd.f32 %v680, %v728
        %v730 = vpop.f32.mrf.mxu0
        %v731 = vadd.f32 %v682, %v730
        %732 = vmatmul.bf16.gmra.mxu0 %v343
        %v733 = vpop.f32.mrf.mxu0
        %v734 = vadd.f32 %v685, %v733
        %v735 = vpop.f32.mrf.mxu0
        %v736 = vadd.f32 %v687, %v735
        %737 = vdwg.mxu0
        %v738 = vmax.f32 %v601, 0.0
        %v739 = vmax.f32 %v699, 0.0
        %v740 = vmax.f32 %v603, 0.0
        %v741 = vmax.f32 %v701, 0.0
        %v742 = vmax.f32 %v606, 0.0
        %v743 = vmax.f32 %v704, 0.0
        %v744 = vmax.f32 %v608, 0.0
        %v745 = vmax.f32 %v706, 0.0
        %v746 = vmax.f32 %v611, 0.0
        %v747 = vmax.f32 %v709, 0.0
        %v748 = vmax.f32 %v613, 0.0
        %v749 = vmax.f32 %v711, 0.0
        %v750 = vmax.f32 %v616, 0.0
        %v751 = vmax.f32 %v714, 0.0
        %v752 = vmax.f32 %v618, 0.0
        %v753 = vmax.f32 %v716, 0.0
        %v754 = vmax.f32 %v621, 0.0
        %v755 = vmax.f32 %v719, 0.0
        %v756 = vmax.f32 %v623, 0.0
        %v757 = vmax.f32 %v721, 0.0
        %v758 = vmax.f32 %v626, 0.0
        %v759 = vmax.f32 %v724, 0.0
        %v760 = vmax.f32 %v628, 0.0
        %v761 = vmax.f32 %v726, 0.0
        %v762 = vmax.f32 %v631, 0.0
        %v763 = vmax.f32 %v729, 0.0
        %v764 = vmax.f32 %v633, 0.0
        %v765 = vmax.f32 %v731, 0.0
        %v766 = vmax.f32 %v636, 0.0
        %v767 = vmax.f32 %v734, 0.0
        %v768 = vmax.f32 %v638, 0.0
        %v769 = vmax.f32 %v736, 0.0
        %v770 = vpack.c.bf16 %v740, %v738
        %v771 = vpack.c.bf16 %v741, %v739
        %v772 = vpack.c.bf16 %v744, %v742
        %v773 = vpack.c.bf16 %v745, %v743
        %v774 = vpack.c.bf16 %v748, %v746
        %v775 = vpack.c.bf16 %v749, %v747
        %v776 = vpack.c.bf16 %v752, %v750
        %v777 = vpack.c.bf16 %v753, %v751
        %v778 = vpack.c.bf16 %v756, %v754
        %v779 = vpack.c.bf16 %v757, %v755
        %v780 = vpack.c.bf16 %v760, %v758
        %v781 = vpack.c.bf16 %v761, %v759
        %v782 = vpack.c.bf16 %v764, %v762
        %v783 = vpack.c.bf16 %v765, %v763
        %v784 = vpack.c.bf16 %v768, %v766
        %v785 = vpack.c.bf16 %v769, %v767
        %v786 = vld [vmem:[#allocation8] sm:$0xff]
        %v787 = vld [vmem:[#allocation8 + $0x8] sm:$0xff]
        %v788 = vld [vmem:[#allocation8 + $0x10] sm:$0xff]
        %v789 = vld [vmem:[#allocation8 + $0x18] sm:$0xff]
        %v790 = vld [vmem:[#allocation8 + $0x20] sm:$0xff]
        %v791 = vld [vmem:[#allocation8 + $0x28] sm:$0xff]
        %v792 = vld [vmem:[#allocation8 + $0x30] sm:$0xff]
        %v793 = vld [vmem:[#allocation8 + $0x38] sm:$0xff]
        %v794 = vld [vmem:[#allocation8 + $0x40] sm:$0xff]
        %v795 = vld [vmem:[#allocation8 + $0x48] sm:$0xff]
        %v796 = vld [vmem:[#allocation8 + $0x50] sm:$0xff]
        %v797 = vld [vmem:[#allocation8 + $0x58] sm:$0xff]
        %v798 = vld [vmem:[#allocation8 + $0x60] sm:$0xff]
        %v799 = vld [vmem:[#allocation8 + $0x68] sm:$0xff]
        %v800 = vld [vmem:[#allocation8 + $0x70] sm:$0xff]
        %v801 = vld [vmem:[#allocation8 + $0x78] sm:$0xff]
        %v802 = vld [vmem:[#allocation8 + $0x80] sm:$0xff]
        %v803 = vld [vmem:[#allocation8 + $0x88] sm:$0xff]
        %v804 = vld [vmem:[#allocation8 + $0x90] sm:$0xff]
        %v805 = vld [vmem:[#allocation8 + $0x98] sm:$0xff]
        %v806 = vld [vmem:[#allocation8 + $0xa0] sm:$0xff]
        %v807 = vld [vmem:[#allocation8 + $0xa8] sm:$0xff]
        %v808 = vld [vmem:[#allocation8 + $0xb0] sm:$0xff]
        %v809 = vld [vmem:[#allocation8 + $0xb8] sm:$0xff]
        %v810 = vld [vmem:[#allocation8 + $0xc0] sm:$0xff]
        %v811 = vld [vmem:[#allocation8 + $0xc8] sm:$0xff]
        %v812 = vld [vmem:[#allocation8 + $0xd0] sm:$0xff]
        %v813 = vld [vmem:[#allocation8 + $0xd8] sm:$0xff]
        %v814 = vld [vmem:[#allocation8 + $0xe0] sm:$0xff]
        %v815 = vld [vmem:[#allocation8 + $0xe8] sm:$0xff]
        %v816 = vld [vmem:[#allocation8 + $0xf0] sm:$0xff]
        %v817 = vld [vmem:[#allocation8 + $0xf8] sm:$0xff]
        %v818 = vld [vmem:[%s4] sm:$0x3]
        %v820 = vperm.slane %v818, 0
        %v821 = vperm.slane %v818, 1
        %v856 = vunpack.c.l.b16 %v786
        %v857 = vunpack.c.h.b16 %v786
        %v858 = vunpack.c.l.b16 %v787
        %v859 = vunpack.c.h.b16 %v787
        %v860 = vunpack.c.l.b16 %v788
        %v861 = vunpack.c.h.b16 %v788
        %v862 = vunpack.c.l.b16 %v789
        %v863 = vunpack.c.h.b16 %v789
        %v864 = vunpack.c.l.b16 %v790
        %v865 = vunpack.c.h.b16 %v790
        %v866 = vunpack.c.l.b16 %v791
        %v867 = vunpack.c.h.b16 %v791
        %v868 = vunpack.c.l.b16 %v792
        %v869 = vunpack.c.h.b16 %v792
        %v870 = vunpack.c.l.b16 %v793
        %v871 = vunpack.c.h.b16 %v793
        %v872 = vunpack.c.l.b16 %v794
        %v873 = vunpack.c.h.b16 %v794
        %v874 = vunpack.c.l.b16 %v795
        %v875 = vunpack.c.h.b16 %v795
        %v876 = vunpack.c.l.b16 %v796
        %v877 = vunpack.c.h.b16 %v796
        %v878 = vunpack.c.l.b16 %v797
        %v879 = vunpack.c.h.b16 %v797
        %v880 = vunpack.c.l.b16 %v798
        %v881 = vunpack.c.h.b16 %v798
        %v882 = vunpack.c.l.b16 %v799
        %v883 = vunpack.c.h.b16 %v799
        %v884 = vunpack.c.l.b16 %v800
        %v885 = vunpack.c.h.b16 %v800
        %v886 = vunpack.c.l.b16 %v801
        %v887 = vunpack.c.h.b16 %v801
        %v888 = vunpack.c.l.b16 %v802
        %v889 = vunpack.c.h.b16 %v802
        %v890 = vunpack.c.l.b16 %v803
        %v891 = vunpack.c.h.b16 %v803
        %v892 = vunpack.c.l.b16 %v804
        %v893 = vunpack.c.h.b16 %v804
        %v894 = vunpack.c.l.b16 %v805
        %v895 = vunpack.c.h.b16 %v805
        %v896 = vunpack.c.l.b16 %v806
        %v897 = vunpack.c.h.b16 %v806
        %v898 = vunpack.c.l.b16 %v807
        %v899 = vunpack.c.h.b16 %v807
        %v900 = vunpack.c.l.b16 %v808
        %v901 = vunpack.c.h.b16 %v808
        %v902 = vunpack.c.l.b16 %v809
        %v903 = vunpack.c.h.b16 %v809
        %v904 = vunpack.c.l.b16 %v810
        %v905 = vunpack.c.h.b16 %v810
        %v906 = vunpack.c.l.b16 %v811
        %v907 = vunpack.c.h.b16 %v811
        %v908 = vunpack.c.l.b16 %v812
        %v909 = vunpack.c.h.b16 %v812
        %v910 = vunpack.c.l.b16 %v813
        %v911 = vunpack.c.h.b16 %v813
        %v912 = vunpack.c.l.b16 %v814
        %v913 = vunpack.c.h.b16 %v814
        %v914 = vunpack.c.l.b16 %v815
        %v915 = vunpack.c.h.b16 %v815
        %v916 = vunpack.c.l.b16 %v816
        %v917 = vunpack.c.h.b16 %v816
        %v918 = vunpack.c.l.b16 %v817
        %v919 = vunpack.c.h.b16 %v817
        %v920 = vpack.c.b16 %v858, %v856
        %v921 = vpack.c.b16 %v859, %v857
        %v922 = vpack.c.b16 %v862, %v860
        %v923 = vpack.c.b16 %v863, %v861
        %v924 = vpack.c.b16 %v866, %v864
        %v925 = vpack.c.b16 %v867, %v865
        %v926 = vpack.c.b16 %v870, %v868
        %v927 = vpack.c.b16 %v871, %v869
        %v928 = vpack.c.b16 %v874, %v872
        %v929 = vpack.c.b16 %v875, %v873
        %v930 = vpack.c.b16 %v878, %v876
        %v931 = vpack.c.b16 %v879, %v877
        %v932 = vpack.c.b16 %v882, %v880
        %v933 = vpack.c.b16 %v883, %v881
        %v934 = vpack.c.b16 %v886, %v884
        %v935 = vpack.c.b16 %v887, %v885
        %v936 = vpack.c.b16 %v890, %v888
        %v937 = vpack.c.b16 %v891, %v889
        %v938 = vpack.c.b16 %v894, %v892
        %v939 = vpack.c.b16 %v895, %v893
        %v940 = vpack.c.b16 %v898, %v896
        %v941 = vpack.c.b16 %v899, %v897
        %v942 = vpack.c.b16 %v902, %v900
        %v943 = vpack.c.b16 %v903, %v901
        %v944 = vpack.c.b16 %v906, %v904
        %v945 = vpack.c.b16 %v907, %v905
        %v946 = vpack.c.b16 %v910, %v908
        %v947 = vpack.c.b16 %v911, %v909
        %v948 = vpack.c.b16 %v914, %v912
        %v949 = vpack.c.b16 %v915, %v913
        %v950 = vpack.c.b16 %v918, %v916
        %v951 = vpack.c.b16 %v919, %v917
        %984 = vmatpush.bf16.msra.mxu0 %v934
        %985 = vmatpush.bf16.msra.mxu0 %v932
        %986 = vmatpush.bf16.msra.mxu0 %v930
        %987 = vmatpush.bf16.msra.mxu0 %v928
        %988 = vmatpush.bf16.msra.mxu0 %v926
        %989 = vmatpush.bf16.msra.mxu0 %v924
        %990 = vmatpush.bf16.msra.mxu0 %v922
        %991 = vmatpush.bf16.msra.mxu0 %v920
        %992 = vmatmul.bf16.gmra.mxu0 %v770
        %v993 = vpop.f32.mrf.mxu0
        %v994 = vadd.f32 %v820, %v993
        %v995 = vpop.f32.mrf.mxu0
        %v996 = vadd.f32 %v820, %v995
        %997 = vmatmul.bf16.gmra.mxu0 %v772
        %v998 = vpop.f32.mrf.mxu0
        %v999 = vadd.f32 %v820, %v998
        %v1000 = vpop.f32.mrf.mxu0
        %v1001 = vadd.f32 %v820, %v1000
        %1002 = vmatmul.bf16.gmra.mxu0 %v774
        %v1003 = vpop.f32.mrf.mxu0
        %v1004 = vadd.f32 %v820, %v1003
        %v1005 = vpop.f32.mrf.mxu0
        %v1006 = vadd.f32 %v820, %v1005
        %1007 = vmatmul.bf16.gmra.mxu0 %v776
        %v1008 = vpop.f32.mrf.mxu0
        %v1009 = vadd.f32 %v820, %v1008
        %v1010 = vpop.f32.mrf.mxu0
        %v1011 = vadd.f32 %v820, %v1010
        %1012 = vmatmul.bf16.gmra.mxu0 %v778
        %v1013 = vpop.f32.mrf.mxu0
        %v1014 = vadd.f32 %v820, %v1013
        %v1015 = vpop.f32.mrf.mxu0
        %v1016 = vadd.f32 %v820, %v1015
        %1017 = vmatmul.bf16.gmra.mxu0 %v780
        %v1018 = vpop.f32.mrf.mxu0
        %v1019 = vadd.f32 %v820, %v1018
        %v1020 = vpop.f32.mrf.mxu0
        %v1021 = vadd.f32 %v820, %v1020
        %1022 = vmatmul.bf16.gmra.mxu0 %v782
        %v1023 = vpop.f32.mrf.mxu0
        %v1024 = vadd.f32 %v820, %v1023
        %v1025 = vpop.f32.mrf.mxu0
        %v1026 = vadd.f32 %v820, %v1025
        %1027 = vmatmul.bf16.gmra.mxu0 %v784
        %v1028 = vpop.f32.mrf.mxu0
        %v1029 = vadd.f32 %v820, %v1028
        %v1030 = vpop.f32.mrf.mxu0
        %v1031 = vadd.f32 %v820, %v1030
        %1032 = vdwg.mxu0
        %1033 = vmatpush.bf16.msra.mxu0 %v950
        %1034 = vmatpush.bf16.msra.mxu0 %v948
        %1035 = vmatpush.bf16.msra.mxu0 %v946
        %1036 = vmatpush.bf16.msra.mxu0 %v944
        %1037 = vmatpush.bf16.msra.mxu0 %v942
        %1038 = vmatpush.bf16.msra.mxu0 %v940
        %1039 = vmatpush.bf16.msra.mxu0 %v938
        %1040 = vmatpush.bf16.msra.mxu0 %v936
        %1041 = vmatmul.bf16.gmra.mxu0 %v771
        %v1042 = vpop.f32.mrf.mxu0
        %v1043 = vadd.f32 %v994, %v1042
        %v1044 = vpop.f32.mrf.mxu0
        %v1045 = vadd.f32 %v996, %v1044
        %1046 = vmatmul.bf16.gmra.mxu0 %v773
        %v1047 = vpop.f32.mrf.mxu0
        %v1048 = vadd.f32 %v999, %v1047
        %v1049 = vpop.f32.mrf.mxu0
        %v1050 = vadd.f32 %v1001, %v1049
        %1051 = vmatmul.bf16.gmra.mxu0 %v775
        %v1052 = vpop.f32.mrf.mxu0
        %v1053 = vadd.f32 %v1004, %v1052
        %v1054 = vpop.f32.mrf.mxu0
        %v1055 = vadd.f32 %v1006, %v1054
        %1056 = vmatmul.bf16.gmra.mxu0 %v777
        %v1057 = vpop.f32.mrf.mxu0
        %v1058 = vadd.f32 %v1009, %v1057
        %v1059 = vpop.f32.mrf.mxu0
        %v1060 = vadd.f32 %v1011, %v1059
        %1061 = vmatmul.bf16.gmra.mxu0 %v779
        %v1062 = vpop.f32.mrf.mxu0
        %v1063 = vadd.f32 %v1014, %v1062
        %v1064 = vpop.f32.mrf.mxu0
        %v1065 = vadd.f32 %v1016, %v1064
        %1066 = vmatmul.bf16.gmra.mxu0 %v781
        %v1067 = vpop.f32.mrf.mxu0
        %v1068 = vadd.f32 %v1019, %v1067
        %v1069 = vpop.f32.mrf.mxu0
        %v1070 = vadd.f32 %v1021, %v1069
        %1071 = vmatmul.bf16.gmra.mxu0 %v783
        %v1072 = vpop.f32.mrf.mxu0
        %v1073 = vadd.f32 %v1024, %v1072
        %v1074 = vpop.f32.mrf.mxu0
        %v1075 = vadd.f32 %v1026, %v1074
        %1076 = vmatmul.bf16.gmra.mxu0 %v785
        %v1077 = vpop.f32.mrf.mxu0
        %v1078 = vadd.f32 %v1029, %v1077
        %v1079 = vpop.f32.mrf.mxu0
        %v1080 = vadd.f32 %v1031, %v1079
        %1081 = vdwg.mxu0
        %1082 = vmatpush.bf16.msra.mxu0 %v935
        %1083 = vmatpush.bf16.msra.mxu0 %v933
        %1084 = vmatpush.bf16.msra.mxu0 %v931
        %1085 = vmatpush.bf16.msra.mxu0 %v929
        %1086 = vmatpush.bf16.msra.mxu0 %v927
        %1087 = vmatpush.bf16.msra.mxu0 %v925
        %1088 = vmatpush.bf16.msra.mxu0 %v923
        %1089 = vmatpush.bf16.msra.mxu0 %v921
        %1090 = vmatmul.bf16.gmra.mxu0 %v770
        %v1091 = vpop.f32.mrf.mxu0
        %v1092 = vadd.f32 %v821, %v1091
        %v1093 = vpop.f32.mrf.mxu0
        %v1094 = vadd.f32 %v821, %v1093
        %1095 = vmatmul.bf16.gmra.mxu0 %v772
        %v1096 = vpop.f32.mrf.mxu0
        %v1097 = vadd.f32 %v821, %v1096
        %v1098 = vpop.f32.mrf.mxu0
        %v1099 = vadd.f32 %v821, %v1098
        %1100 = vmatmul.bf16.gmra.mxu0 %v774
        %v1101 = vpop.f32.mrf.mxu0
        %v1102 = vadd.f32 %v821, %v1101
        %v1103 = vpop.f32.mrf.mxu0
        %v1104 = vadd.f32 %v821, %v1103
        %1105 = vmatmul.bf16.gmra.mxu0 %v776
        %v1106 = vpop.f32.mrf.mxu0
        %v1107 = vadd.f32 %v821, %v1106
        %v1108 = vpop.f32.mrf.mxu0
        %v1109 = vadd.f32 %v821, %v1108
        %1110 = vmatmul.bf16.gmra.mxu0 %v778
        %v1111 = vpop.f32.mrf.mxu0
        %v1112 = vadd.f32 %v821, %v1111
        %v1113 = vpop.f32.mrf.mxu0
        %v1114 = vadd.f32 %v821, %v1113
        %1115 = vmatmul.bf16.gmra.mxu0 %v780
        %v1116 = vpop.f32.mrf.mxu0
        %v1117 = vadd.f32 %v821, %v1116
        %v1118 = vpop.f32.mrf.mxu0
        %v1119 = vadd.f32 %v821, %v1118
        %1120 = vmatmul.bf16.gmra.mxu0 %v782
        %v1121 = vpop.f32.mrf.mxu0
        %v1122 = vadd.f32 %v821, %v1121
        %v1123 = vpop.f32.mrf.mxu0
        %v1124 = vadd.f32 %v821, %v1123
        %1125 = vmatmul.bf16.gmra.mxu0 %v784
        %v1126 = vpop.f32.mrf.mxu0
        %v1127 = vadd.f32 %v821, %v1126
        %v1128 = vpop.f32.mrf.mxu0
        %v1129 = vadd.f32 %v821, %v1128
        %1130 = vdwg.mxu0
        %1131 = vmatpush.bf16.msra.mxu0 %v951
        %1132 = vmatpush.bf16.msra.mxu0 %v949
        %1133 = vmatpush.bf16.msra.mxu0 %v947
        %1134 = vmatpush.bf16.msra.mxu0 %v945
        %1135 = vmatpush.bf16.msra.mxu0 %v943
        %1136 = vmatpush.bf16.msra.mxu0 %v941
        %1137 = vmatpush.bf16.msra.mxu0 %v939
        %1138 = vmatpush.bf16.msra.mxu0 %v937
        %1139 = vmatmul.bf16.gmra.mxu0 %v771
        %v1140 = vpop.f32.mrf.mxu0
        %v1141 = vadd.f32 %v1092, %v1140
        %v1142 = vpop.f32.mrf.mxu0
        %v1143 = vadd.f32 %v1094, %v1142
        %1144 = vmatmul.bf16.gmra.mxu0 %v773
        %v1145 = vpop.f32.mrf.mxu0
        %v1146 = vadd.f32 %v1097, %v1145
        %v1147 = vpop.f32.mrf.mxu0
        %v1148 = vadd.f32 %v1099, %v1147
        %1149 = vmatmul.bf16.gmra.mxu0 %v775
        %v1150 = vpop.f32.mrf.mxu0
        %v1151 = vadd.f32 %v1102, %v1150
        %v1152 = vpop.f32.mrf.mxu0
        %v1153 = vadd.f32 %v1104, %v1152
        %1154 = vmatmul.bf16.gmra.mxu0 %v777
        %v1155 = vpop.f32.mrf.mxu0
        %v1156 = vadd.f32 %v1107, %v1155
        %v1157 = vpop.f32.mrf.mxu0
        %v1158 = vadd.f32 %v1109, %v1157
        %1159 = vmatmul.bf16.gmra.mxu0 %v779
        %v1160 = vpop.f32.mrf.mxu0
        %v1161 = vadd.f32 %v1112, %v1160
        %v1162 = vpop.f32.mrf.mxu0
        %v1163 = vadd.f32 %v1114, %v1162
        %1164 = vmatmul.bf16.gmra.mxu0 %v781
        %v1165 = vpop.f32.mrf.mxu0
        %v1166 = vadd.f32 %v1117, %v1165
        %v1167 = vpop.f32.mrf.mxu0
        %v1168 = vadd.f32 %v1119, %v1167
        %1169 = vmatmul.bf16.gmra.mxu0 %v783
        %v1170 = vpop.f32.mrf.mxu0
        %v1171 = vadd.f32 %v1122, %v1170
        %v1172 = vpop.f32.mrf.mxu0
        %v1173 = vadd.f32 %v1124, %v1172
        %1174 = vmatmul.bf16.gmra.mxu0 %v785
        %v1175 = vpop.f32.mrf.mxu0
        %v1176 = vadd.f32 %v1127, %v1175
        %v1177 = vpop.f32.mrf.mxu0
        %v1178 = vadd.f32 %v1129, %v1177
        %1179 = vdwg.mxu0
        %v1180 = vmax.f32 %v1043, 0.0
        %v1181 = vmax.f32 %v1141, 0.0
        %v1182 = vmax.f32 %v1045, 0.0
        %v1183 = vmax.f32 %v1143, 0.0
        %v1184 = vmax.f32 %v1048, 0.0
        %v1185 = vmax.f32 %v1146, 0.0
        %v1186 = vmax.f32 %v1050, 0.0
        %v1187 = vmax.f32 %v1148, 0.0
        %v1188 = vmax.f32 %v1053, 0.0
        %v1189 = vmax.f32 %v1151, 0.0
        %v1190 = vmax.f32 %v1055, 0.0
        %v1191 = vmax.f32 %v1153, 0.0
        %v1192 = vmax.f32 %v1058, 0.0
        %v1193 = vmax.f32 %v1156, 0.0
        %v1194 = vmax.f32 %v1060, 0.0
        %v1195 = vmax.f32 %v1158, 0.0
        %v1196 = vmax.f32 %v1063, 0.0
        %v1197 = vmax.f32 %v1161, 0.0
        %v1198 = vmax.f32 %v1065, 0.0
        %v1199 = vmax.f32 %v1163, 0.0
        %v1200 = vmax.f32 %v1068, 0.0
        %v1201 = vmax.f32 %v1166, 0.0
        %v1202 = vmax.f32 %v1070, 0.0
        %v1203 = vmax.f32 %v1168, 0.0
        %v1204 = vmax.f32 %v1073, 0.0
        %v1205 = vmax.f32 %v1171, 0.0
        %v1206 = vmax.f32 %v1075, 0.0
        %v1207 = vmax.f32 %v1173, 0.0
        %v1208 = vmax.f32 %v1078, 0.0
        %v1209 = vmax.f32 %v1176, 0.0
        %v1210 = vmax.f32 %v1080, 0.0
        %v1211 = vmax.f32 %v1178, 0.0
        %v1212 = vadd.f32 %v1180, %v296
        %v1213 = vadd.f32 %v1181, %v297
        %v1214 = vadd.f32 %v1182, %v298
        %v1215 = vadd.f32 %v1183, %v299
        %v1216 = vadd.f32 %v1184, %v300
        %v1217 = vadd.f32 %v1185, %v301
        %v1218 = vadd.f32 %v1186, %v302
        %v1219 = vadd.f32 %v1187, %v303
        %v1220 = vadd.f32 %v1188, %v304
        %v1221 = vadd.f32 %v1189, %v305
        %v1222 = vadd.f32 %v1190, %v306
        %v1223 = vadd.f32 %v1191, %v307
        %v1224 = vadd.f32 %v1192, %v308
        %v1225 = vadd.f32 %v1193, %v309
        %v1226 = vadd.f32 %v1194, %v310
        %v1227 = vadd.f32 %v1195, %v311
        %v1228 = vadd.f32 %v1196, %v312
        %v1229 = vadd.f32 %v1197, %v313
        %v1230 = vadd.f32 %v1198, %v314
        %v1231 = vadd.f32 %v1199, %v315
        %v1232 = vadd.f32 %v1200, %v316
        %v1233 = vadd.f32 %v1201, %v317
        %v1234 = vadd.f32 %v1202, %v318
        %v1235 = vadd.f32 %v1203, %v319
        %v1236 = vadd.f32 %v1204, %v320
        %v1237 = vadd.f32 %v1205, %v321
        %v1238 = vadd.f32 %v1206, %v322
        %v1239 = vadd.f32 %v1207, %v323
        %v1240 = vadd.f32 %v1208, %v324
        %v1241 = vadd.f32 %v1209, %v325
        %v1242 = vadd.f32 %v1210, %v326
        %v1243 = vadd.f32 %v1211, %v327
        %1244 = vst [vmem:[%s293] sm:$0xff] %v1212
        %1245 = vst [vmem:[%s293 + $0x8] sm:$0xff] %v1213
        %1246 = vst [vmem:[%s293 + $0x10] sm:$0xff] %v1214
        %1247 = vst [vmem:[%s293 + $0x18] sm:$0xff] %v1215
        %1248 = vst [vmem:[%s293 + $0x20] sm:$0xff] %v1216
        %1249 = vst [vmem:[%s293 + $0x28] sm:$0xff] %v1217
        %1250 = vst [vmem:[%s293 + $0x30] sm:$0xff] %v1218
        %1251 = vst [vmem:[%s293 + $0x38] sm:$0xff] %v1219
        %1252 = vst [vmem:[%s293 + $0x40] sm:$0xff] %v1220
        %1253 = vst [vmem:[%s293 + $0x48] sm:$0xff] %v1221
        %1254 = vst [vmem:[%s293 + $0x50] sm:$0xff] %v1222
        %1255 = vst [vmem:[%s293 + $0x58] sm:$0xff] %v1223
        %1256 = vst [vmem:[%s293 + $0x60] sm:$0xff] %v1224
        %1257 = vst [vmem:[%s293 + $0x68] sm:$0xff] %v1225
        %1258 = vst [vmem:[%s293 + $0x70] sm:$0xff] %v1226
        %1259 = vst [vmem:[%s293 + $0x78] sm:$0xff] %v1227
        %1260 = vst [vmem:[%s293 + $0x80] sm:$0xff] %v1228
        %1261 = vst [vmem:[%s293 + $0x88] sm:$0xff] %v1229
        %1262 = vst [vmem:[%s293 + $0x90] sm:$0xff] %v1230
        %1263 = vst [vmem:[%s293 + $0x98] sm:$0xff] %v1231
        %1264 = vst [vmem:[%s293 + $0xa0] sm:$0xff] %v1232
        %1265 = vst [vmem:[%s293 + $0xa8] sm:$0xff] %v1233
        %1266 = vst [vmem:[%s293 + $0xb0] sm:$0xff] %v1234
        %1267 = vst [vmem:[%s293 + $0xb8] sm:$0xff] %v1235
        %1268 = vst [vmem:[%s293 + $0xc0] sm:$0xff] %v1236
        %1269 = vst [vmem:[%s293 + $0xc8] sm:$0xff] %v1237
        %1270 = vst [vmem:[%s293 + $0xd0] sm:$0xff] %v1238
        %1271 = vst [vmem:[%s293 + $0xd8] sm:$0xff] %v1239
        %1272 = vst [vmem:[%s293 + $0xe0] sm:$0xff] %v1240
        %1273 = vst [vmem:[%s293 + $0xe8] sm:$0xff] %v1241
        %1274 = vst [vmem:[%s293 + $0xf0] sm:$0xff] %v1242
        %1275 = vst [vmem:[%s293 + $0xf8] sm:$0xff] %v1243
        %s1276 = sand.u32 %s142, 1
        %s1277 = scalar_lea.sflag [#allocation4], %s1276
        %s1278 = sand.u32 %s142, 1
        %s1279 = smul.addr %s1278, 256
        %s1280 = scalar_lea.vmem [#allocation10], %s1279
        // Predicated region
        $region57: #{tpu_custom_call.1} parent=39 // pred_check
          %p1281 = pneg %p152
        $region58: #{tpu_custom_call.1} parent=39 // pred_check_branch
          %1283 = sbr.rel (%p1281) target = $region60
        $region59: #{tpu_custom_call.1} parent=39 // pred_region
          %s1284 = smul.u32 16, %s24
          %1286 = vsyncadd %s1277, 0
          %s1287 = smul.addr %s1284, 2
          %s1288 = smul.addr %s1287, 8
          %s1289 = scalar_lea.hbm %s5, %s1288
          %s1290 = sshll.u32 %s1280, 4
          %s1291 = int_to_ptr.vmem [resolvable:$true] %s1290
          %s1292 = sshll.u32 %s1289, 4
          %s1293 = int_to_ptr.hbm [resolvable:$true] %s1292
          %1298 = dma.vmem_to_hbm [thread:$0]  %s1291, 4096, %s1293, %s1277, 256, 256, 16
        $region60: #{tpu_custom_call.1} parent=39 // pred_fallthru
          _
      $region40: #{tpu_custom_call.1} parent=5 // pred_fallthru
        _
      %p1299 = scmp.le.s32.totalorder 2, %s19
      // Predicated region
      $region61: #{tpu_custom_call.1} parent=5 // pred_check
        %p1300 = pneg %p1299
      $region62: #{tpu_custom_call.1} parent=5 // pred_check_branch
        %1302 = sbr.rel (%p1300) target = $region64
      $region63: #{tpu_custom_call.1} parent=5 // pred_region
        %s1303 = ssub.s32 %s19, 2
        // Predicated region
        $region65: #{tpu_custom_call.1} parent=63 // pred_check
          %p1304 = pneg %p158
        $region66: #{tpu_custom_call.1} parent=63 // pred_check_branch
          %1306 = sbr.rel (%p1304) target = $region68
        $region67: #{tpu_custom_call.1} parent=63 // pred_region
          %s1307 = sand.u32 %s143, 1
          %s1308 = scalar_lea.sflag [#allocation4], %s1307
          %s1309 = sand.u32 %s143, 1
          %s1310 = smul.addr %s1309, 256
          %s1311 = scalar_lea.vmem [#allocation10], %s1310
          %1313 = dma.done %s1308, 4096
        $region68: #{tpu_custom_call.1} parent=63 // pred_fallthru
          _
      $region64: #{tpu_custom_call.1} parent=5 // pred_fallthru
        _
    $region6: #{tpu_custom_call.1} parent=1 // loop_footer
      %s23 = sadd.s32 1, %s19
    $region7: #{tpu_custom_call.1} parent=1 // loop_footer_branch
      %18 = sbr.rel target = $region3
    $region8: #{tpu_custom_call.1} parent=1 // loop_exit
      _
    %1314 = vsyncpa [#allocation3], 1
    %s1315 = scalar_lea.sflag [#allocation3], 1
    %1316 = vsyncpa %s1315, 1
    %1317 = vsyncpa [#allocation6], 1
    %1318 = vsyncpa [#allocation9], 1
    %1319 = vsyncpa [#allocation4], 1
    %s1320 = scalar_lea.sflag [#allocation4], 1
    %1321 = vsyncpa %s1320, 1

</llo_original>
